<compile_context>
chip_gen: v7x
topology: tpu7x:2x2x1
jax: 0.10.0
libtpu: 0.0.40
codegen_flags: <defaults>
</compile_context>

<pallas_src>
import functools

import jax
import jax.numpy as jnp
from jax import lax
from jax.experimental import pallas as pl
from jax.experimental.pallas import tpu as pltpu

# Column (lane) direction: fused (bilinear 2x upsample + reflect pad + 5-tap
# blur) expressed as a 7-tap stencil on the width-expanded input (see
# _expand_width); one tap set per output-column parity.
_G_EVEN = (1 / 64, 3 / 64, 18 / 64, 22 / 64, 13 / 64, 7 / 64, 0.0)
_G_ODD = (0.0, 7 / 64, 13 / 64, 22 / 64, 18 / 64, 3 / 64, 1 / 64)
# Row (sublane) direction: true polyphase taps on original-resolution rows
# (the classic Burt-Adelson pyrUp even/odd phase kernels).
_R_EVEN = (1 / 64, 21 / 64, 35 / 64, 7 / 64)
_R_ODD = (7 / 64, 35 / 64, 21 / 64, 1 / 64)


def _round_up(v, m):
    return ((v + m - 1) // m) * m


def _expand_width(a):
    """(..., W) -> (..., 2W+6) width-expanded rows so that the fused
    (bilinear 2x upsample, reflect pad 2, [1,4,6,4,1]/16 blur) along the last
    axis equals the 7-tap parity stencil (_G_EVEN/_G_ODD) applied to the
    result.  Purely per-row; verified against the direct formulation."""
    n = a.shape[-1]

    def s(i):
        return lax.slice_in_dim(a, i, i + 1, axis=-1)

    x0, x1 = s(0), s(1)
    xl, xl2 = s(n - 1), s(n - 2)
    dbl = jnp.repeat(a, 2, axis=-1)               # d[j] = x[j // 2]
    mid = lax.slice_in_dim(dbl, 1, 2 * n - 1, axis=-1)
    pieces = [
        x0, x1,
        0.625 * x0 + 0.375 * x1,
        1.125 * x0 - 0.125 * x1,
        mid,
        1.125 * xl - 0.125 * xl2,
        0.625 * xl + 0.375 * xl2,
        xl2, xl,
    ]
    return jnp.concatenate(pieces, axis=-1)


def _vmem_budget_bytes():
    """(per-step working-set target, vmem_limit_bytes) per TPU generation."""
    cap = None
    try:
        cap = getattr(pltpu.get_tpu_info(), "vmem_capacity_bytes", None)
    except Exception:
        cap = None
    if cap is None:
        cap = 64 * 1024 * 1024
    if cap >= 100 * 1024 * 1024:                    # v5e / v6e: 128 MiB VMEM
        return 64 * 1024 * 1024, 100 * 1024 * 1024
    return 20 * 1024 * 1024, 44 * 1024 * 1024       # v7x: 64 MiB per core


def _pyrup_kernel(main_ref, halo_ref, o_ref, t_ref, *, to2, w2, num_strips,
                  r_last):
    """One (plane-batch, row-strip) step of the fused upsample + blur.

    main_ref : (P, to2, w2+6)   padded-input rows [s*to2, (s+1)*to2)
    halo_ref : (P, 8, w2+6)     next 8 padded-input rows (4 of them used)
    o_ref    : (P, to2, 2*w2)   per row pair: [even output row | odd output row]
    t_ref    : (P, to2+8, w2)   f32 scratch: column-processed rows
    """
    p = main_ref.shape[0]

    # ---- column (lane) stage: 7-tap parity stencil, f32 accumulation ----
    col_even = (lax.broadcasted_iota(jnp.int32, (1, 1, w2), 2) % 2) == 0
    wcol = [jnp.where(col_even, ge, go) for ge, go in zip(_G_EVEN, _G_ODD)]

    acc = jnp.zeros((p, to2, w2), jnp.float32)
    for m in range(7):
        acc = acc + wcol[m] * main_ref[:, :, m:m + w2]
    t_ref[:, 0:to2, :] = acc

    acc_h = jnp.zeros((p, 4, w2), jnp.float32)
    for m in range(7):
        acc_h = acc_h + wcol[m] * halo_ref[:, 0:4, m:m + w2]
    t_ref[:, to2:to2 + 4, :] = acc_h

    # ---- row (sublane) stage: 4-tap polyphase, even/odd phases kept apart ----
    even = jnp.zeros((p, to2, w2), jnp.float32)
    odd = jnp.zeros((p, to2, w2), jnp.float32)
    for m in range(4):
        even = even + _R_EVEN[m] * t_ref[:, m:m + to2, :]
        odd = odd + _R_ODD[m] * t_ref[:, m + 1:m + 1 + to2, :]
    o_ref[:, :, 0:w2] = even.astype(o_ref.dtype)
    o_ref[:, :, w2:2 * w2] = odd.astype(o_ref.dtype)

    # ---- exact border corrections (one output row per image border) ----
    s = pl.program_id(1)

    @pl.when(s == 0)
    def _top():
        corr = (t_ref[:, 3:4, :] - t_ref[:, 2:3, :]) * (1.0 / 64.0)
        cur = o_ref[:, 0:1, w2:2 * w2].astype(jnp.float32)
        o_ref[:, 0:1, w2:2 * w2] = (cur + corr).astype(o_ref.dtype)

    @pl.when(s == num_strips - 1)
    def _bottom():
        corr = (t_ref[:, r_last + 1:r_last + 2, :]
                - t_ref[:, r_last + 2:r_last + 3, :]) * (1.0 / 64.0)
        cur = o_ref[:, r_last:r_last + 1, 0:w2].astype(jnp.float32)
        o_ref[:, r_last:r_last + 1, 0:w2] = (cur + corr).astype(o_ref.dtype)


def pyr_up(x, border_type="reflect", align_corners=False, *,
           _max_row_pairs_per_strip=None):
    """PyrUp forward: (B, C, H, W) -> (B, C, 2H, 2W)."""
    if border_type != "reflect":
        # TODO(synk): only the default 'reflect' border mode is implemented.
        raise NotImplementedError("only border_type='reflect' is supported")
    if align_corners:
        raise NotImplementedError("only align_corners=False is supported")
    if x.ndim != 4:
        raise ValueError(f"expected BxCxHxW, got {x.shape}")
    B, C, H, W = x.shape
    if H < 2 or W < 2:
        # torch's reflect pad also rejects these degenerate sizes.
        raise NotImplementedError("H and W must both be >= 2")

    H2, W2 = 2 * H, 2 * W
    Wd = W2 + 6
    NB = B * C
    dtype = x.dtype
    itemsize = jnp.dtype(dtype).itemsize
    xf = x.reshape(NB, H, W)

    budget, vmem_limit = _vmem_budget_bytes()

    # Per-plane per-strip working set (double-buffered blocks + scratch + f32
    # temporaries), used to pick the strip height and plane batch.
    def plane_bytes(rows):
        main = 2 * rows * Wd * itemsize
        halo = 2 * 8 * Wd * itemsize
        outb = 2 * rows * 2 * W2 * itemsize
        tbuf = (rows + 8) * W2 * 4
        temps = 4 * rows * W2 * 4
        return main + halo + outb + tbuf + temps

    # Strip height in output row-pairs (multiple of 8).
    to2 = _round_up(H, 8)
    if _max_row_pairs_per_strip is not None:
        to2 = min(to2, max(8, _round_up(_max_row_pairs_per_strip, 8)))
    while to2 > 8 and plane_bytes(to2) > budget:
        to2 -= 8
    to2 = max(8, to2)

    num_strips = pl.cdiv(H, to2)
    r_last = (H - 1) - (num_strips - 1) * to2

    # Plane batching: amortize per-step overhead when strips are small.
    pb = 1
    for cand in range(1, NB + 1):
        if NB % cand == 0 and cand * plane_bytes(to2) <= budget:
            pb = cand
    # Keep at least two grid steps so both v7x TensorCores get work.
    while pb > 1 and (NB // pb) * num_strips < 2:
        nxt = pb // 2
        while nxt > 1 and NB % nxt != 0:
            nxt -= 1
        pb = max(1, nxt)

    # --- XLA prep: row pads (2 synthetic rows per side + zero tail) and the
    # width expansion.  ~1.06x the *input* size (the 4x doubled intermediate
    # and padded-output slice of the previous version are gone). ---
    r_total = num_strips * to2 + 8
    top = xf[:, 0:2, :].astype(jnp.float32)
    bot = xf[:, H - 2:H, :].astype(jnp.float32)
    p_top2 = (7.0 * top[:, 1:2, :] - 6.0 * top[:, 0:1, :]).astype(dtype)
    p_bot2 = (7.0 * bot[:, 0:1, :] - 6.0 * bot[:, 1:2, :]).astype(dtype)
    tail = jnp.zeros((NB, r_total - (H + 4), W), dtype)
    xr = jnp.concatenate(
        [p_top2, xf[:, 0:1, :], xf, xf[:, H - 1:H, :], p_bot2, tail], axis=1)
    xp = _expand_width(xr)                        # (NB, r_total, 2W + 6)

    kernel = functools.partial(_pyrup_kernel, to2=to2, w2=W2,
                               num_strips=num_strips, r_last=r_last)
    out = pl.pallas_call(
        kernel,
        out_shape=jax.ShapeDtypeStruct((NB, H, 2 * W2), dtype),
        grid=(NB // pb, num_strips),
        in_specs=[
            pl.BlockSpec((pb, to2, Wd), lambda n, s: (n, s, 0)),
            pl.BlockSpec((pb, 8, Wd),
                         lambda n, s: (n, (s + 1) * (to2 // 8), 0)),
        ],
        out_specs=pl.BlockSpec((pb, to2, 2 * W2), lambda n, s: (n, s, 0)),
        scratch_shapes=[pltpu.VMEM((pb, to2 + 8, W2), jnp.float32)],
        compiler_params=pltpu.CompilerParams(
            dimension_semantics=("parallel", "parallel"),
            vmem_limit_bytes=vmem_limit),
    )(xp, xp)

    # (NB, H, 2*W2) row-major is exactly (B, C, 2H, W2): free reshape.
    return out.reshape(B, C, H2, W2)


def _reference_pyr_up(x):
    """Plain-JAX reference: bilinear 2x upsample (align_corners=False) +
    reflect pad + dense 5x5 pyramid-kernel convolution."""
    B, C, H, W = x.shape
    xf = x.reshape(B * C, H, W)

    def up_axis(a, axis):
        n = a.shape[axis]
        idx = jnp.arange(n)
        prev = jnp.take(a, jnp.maximum(idx - 1, 0), axis=axis)
        nxt = jnp.take(a, jnp.minimum(idx + 1, n - 1), axis=axis)
        even = 0.25 * prev + 0.75 * a
        odd = 0.75 * a + 0.25 * nxt
        y = jnp.stack([even, odd], axis=axis + 1)
        shp = list(a.shape)
        shp[axis] = 2 * n
        return y.reshape(shp)

    u = up_axis(up_axis(xf, 1), 2)
    up = jnp.pad(u, ((0, 0), (2, 2), (2, 2)), mode="reflect")
    k1 = jnp.array([1.0, 4.0, 6.0, 4.0, 1.0], jnp.float32) / 16.0
    k2d = jnp.outer(k1, k1)
    out = sum(k2d[i, j] * up[:, i:i + 2 * H, j:j + 2 * W]
              for i in range(5) for j in range(5))
    return out.reshape(B, C, 2 * H, 2 * W)


if __name__ == "__main__":
    key = jax.random.PRNGKey(0)

    # Test 1: module-sized input, single strip per plane.
    B, C, H, W = 2, 4, 16, 16
    x = jax.random.uniform(key, (B, C, H, W), dtype=jnp.float32)
    y = jax.block_until_ready(jax.jit(pyr_up)(x))
    assert y.shape == (B, C, 2 * H, 2 * W), y.shape
    ref = _reference_pyr_up(x)
    err = float(jnp.max(jnp.abs(y - ref)))
    assert jnp.allclose(y, ref, atol=1e-4), f"mismatch, max abs err = {err}"

    # Test 2: multi-strip path with a partial (clipped) last strip, halos and
    # per-border corrections in different grid steps.
    B2, C2, H2_, W2_ = 1, 3, 20, 20
    x2 = jax.random.uniform(jax.random.PRNGKey(0), (B2, C2, H2_, W2_),
                            dtype=jnp.float32)
    f2 = jax.jit(functools.partial(pyr_up, _max_row_pairs_per_strip=8))
    y2 = jax.block_until_ready(f2(x2))
    assert y2.shape == (B2, C2, 2 * H2_, 2 * W2_), y2.shape
    ref2 = _reference_pyr_up(x2)
    err2 = float(jnp.max(jnp.abs(y2 - ref2)))
    assert jnp.allclose(y2, ref2, atol=1e-4), f"mismatch, max abs err = {err2}"

    print("KERNEL_OK")
</pallas_src>

<mosaic_0001>
module attributes {stable_mosaic.version = 11 : i64} {
  func.func @_pyrup_kernel(%arg0: i32, %arg1: i32, %arg2: memref<4x16x38xf32, #tpu.memory_space<vmem>>, %arg3: memref<4x8x38xf32, #tpu.memory_space<vmem>>, %arg4: memref<4x16x64xf32, #tpu.memory_space<vmem>>, %arg5: memref<4x24x32xf32, #tpu.memory_space<vmem>>) attributes {dimension_semantics = [#tpu.dimension_semantics<parallel>, #tpu.dimension_semantics<parallel>], iteration_bounds = array<i64: 2, 1>, scalar_prefetch = 0 : i64, scratch_operands = 1 : i64, tpu.core_type = #tpu.core_type<tc>, window_params = [{transform_indices = @transform_0, window_bounds = array<i64: 4, 16, 38>}, {transform_indices = @transform_1, window_bounds = array<i64: 4, 8, 38>}, {transform_indices = @transform_2, window_bounds = array<i64: 4, 16, 64>}]} {
    %0 = tpu.iota {dimensions = array<i32: 2>} : vector<1x1x32xi32>
    %c2_i32 = arith.constant 2 : i32
    %c0_i32 = arith.constant 0 : i32
    %1 = arith.cmpi eq, %c2_i32, %c0_i32 : i32
    %c1_i32 = arith.constant 1 : i32
    %2 = arith.select %1, %c1_i32, %c2_i32 : i32
    %3 = vector.broadcast %2 : i32 to vector<1x1x32xi32>
    %4 = arith.remsi %0, %3 : vector<1x1x32xi32>
    %c0_i32_0 = arith.constant 0 : i32
    %5 = vector.broadcast %c0_i32_0 : i32 to vector<1x1x32xi32>
    %6 = arith.cmpi ne, %4, %5 : vector<1x1x32xi32>
    %c0_i32_1 = arith.constant 0 : i32
    %7 = vector.broadcast %c0_i32_1 : i32 to vector<1x1x32xi32>
    %8 = arith.cmpi slt, %4, %7 : vector<1x1x32xi32>
    %c0_i32_2 = arith.constant 0 : i32
    %9 = arith.cmpi slt, %2, %c0_i32_2 : i32
    %10 = vector.broadcast %9 : i1 to vector<1x1x32xi1>
    %11 = vector.broadcast %10 : vector<1x1x32xi1> to vector<1x1x32xi1>
    %12 = arith.xori %8, %11 : vector<1x1x32xi1>
    %13 = arith.andi %12, %6 : vector<1x1x32xi1>
    %14 = vector.broadcast %2 : i32 to vector<1x1x32xi32>
    %15 = arith.addi %4, %14 : vector<1x1x32xi32>
    %16 = arith.select %13, %15, %4 : vector<1x1x32xi1>, vector<1x1x32xi32>
    %c0_i32_3 = arith.constant 0 : i32
    %17 = vector.broadcast %c0_i32_3 : i32 to vector<1x1x32xi32>
    %18 = arith.cmpi eq, %16, %17 : vector<1x1x32xi32>
    %cst = arith.constant 1.562500e-02 : f32
    %cst_4 = arith.constant 0.000000e+00 : f32
    %19 = vector.broadcast %cst : f32 to vector<1x1x32xf32>
    %20 = vector.broadcast %cst_4 : f32 to vector<1x1x32xf32>
    %21 = arith.select %18, %19, %20 : vector<1x1x32xi1>, vector<1x1x32xf32>
    %cst_5 = arith.constant 4.687500e-02 : f32
    %cst_6 = arith.constant 1.093750e-01 : f32
    %22 = vector.broadcast %cst_5 : f32 to vector<1x1x32xf32>
    %23 = vector.broadcast %cst_6 : f32 to vector<1x1x32xf32>
    %24 = arith.select %18, %22, %23 : vector<1x1x32xi1>, vector<1x1x32xf32>
    %cst_7 = arith.constant 2.812500e-01 : f32
    %cst_8 = arith.constant 2.031250e-01 : f32
    %25 = vector.broadcast %cst_7 : f32 to vector<1x1x32xf32>
    %26 = vector.broadcast %cst_8 : f32 to vector<1x1x32xf32>
    %27 = arith.select %18, %25, %26 : vector<1x1x32xi1>, vector<1x1x32xf32>
    %cst_9 = arith.constant 3.437500e-01 : f32
    %cst_10 = arith.constant 3.437500e-01 : f32
    %28 = vector.broadcast %cst_9 : f32 to vector<1x1x32xf32>
    %29 = vector.broadcast %cst_10 : f32 to vector<1x1x32xf32>
    %30 = arith.select %18, %28, %29 : vector<1x1x32xi1>, vector<1x1x32xf32>
    %cst_11 = arith.constant 2.031250e-01 : f32
    %cst_12 = arith.constant 2.812500e-01 : f32
    %31 = vector.broadcast %cst_11 : f32 to vector<1x1x32xf32>
    %32 = vector.broadcast %cst_12 : f32 to vector<1x1x32xf32>
    %33 = arith.select %18, %31, %32 : vector<1x1x32xi1>, vector<1x1x32xf32>
    %cst_13 = arith.constant 1.093750e-01 : f32
    %cst_14 = arith.constant 4.687500e-02 : f32
    %34 = vector.broadcast %cst_13 : f32 to vector<1x1x32xf32>
    %35 = vector.broadcast %cst_14 : f32 to vector<1x1x32xf32>
    %36 = arith.select %18, %34, %35 : vector<1x1x32xi1>, vector<1x1x32xf32>
    %cst_15 = arith.constant 0.000000e+00 : f32
    %cst_16 = arith.constant 1.562500e-02 : f32
    %37 = vector.broadcast %cst_15 : f32 to vector<1x1x32xf32>
    %38 = vector.broadcast %cst_16 : f32 to vector<1x1x32xf32>
    %39 = arith.select %18, %37, %38 : vector<1x1x32xi1>, vector<1x1x32xf32>
    %cst_17 = arith.constant 0.000000e+00 : f32
    %40 = vector.broadcast %cst_17 : f32 to vector<4x16x32xf32>
    %c0 = arith.constant 0 : index
    %c0_18 = arith.constant 0 : index
    %c0_19 = arith.constant 0 : index
    %41 = vector.load %arg2[%c0, %c0_18, %c0_19] : memref<4x16x38xf32, #tpu.memory_space<vmem>>, vector<4x16x32xf32>
    %42 = vector.broadcast %21 : vector<1x1x32xf32> to vector<4x16x32xf32>
    %43 = arith.mulf %42, %41 : vector<4x16x32xf32>
    %44 = arith.addf %40, %43 : vector<4x16x32xf32>
    %c0_20 = arith.constant 0 : index
    %c0_21 = arith.constant 0 : index
    %c1 = arith.constant 1 : index
    %45 = vector.load %arg2[%c0_20, %c0_21, %c1] : memref<4x16x38xf32, #tpu.memory_space<vmem>>, vector<4x16x32xf32>
    %46 = vector.broadcast %24 : vector<1x1x32xf32> to vector<4x16x32xf32>
    %47 = arith.mulf %46, %45 : vector<4x16x32xf32>
    %48 = arith.addf %44, %47 : vector<4x16x32xf32>
    %c0_22 = arith.constant 0 : index
    %c0_23 = arith.constant 0 : index
    %c2 = arith.constant 2 : index
    %49 = vector.load %arg2[%c0_22, %c0_23, %c2] : memref<4x16x38xf32, #tpu.memory_space<vmem>>, vector<4x16x32xf32>
    %50 = vector.broadcast %27 : vector<1x1x32xf32> to vector<4x16x32xf32>
    %51 = arith.mulf %50, %49 : vector<4x16x32xf32>
    %52 = arith.addf %48, %51 : vector<4x16x32xf32>
    %c0_24 = arith.constant 0 : index
    %c0_25 = arith.constant 0 : index
    %c3 = arith.constant 3 : index
    %53 = vector.load %arg2[%c0_24, %c0_25, %c3] : memref<4x16x38xf32, #tpu.memory_space<vmem>>, vector<4x16x32xf32>
    %54 = vector.broadcast %30 : vector<1x1x32xf32> to vector<4x16x32xf32>
    %55 = arith.mulf %54, %53 : vector<4x16x32xf32>
    %56 = arith.addf %52, %55 : vector<4x16x32xf32>
    %c0_26 = arith.constant 0 : index
    %c0_27 = arith.constant 0 : index
    %c4 = arith.constant 4 : index
    %57 = vector.load %arg2[%c0_26, %c0_27, %c4] : memref<4x16x38xf32, #tpu.memory_space<vmem>>, vector<4x16x32xf32>
    %58 = vector.broadcast %33 : vector<1x1x32xf32> to vector<4x16x32xf32>
    %59 = arith.mulf %58, %57 : vector<4x16x32xf32>
    %60 = arith.addf %56, %59 : vector<4x16x32xf32>
    %c0_28 = arith.constant 0 : index
    %c0_29 = arith.constant 0 : index
    %c5 = arith.constant 5 : index
    %61 = vector.load %arg2[%c0_28, %c0_29, %c5] : memref<4x16x38xf32, #tpu.memory_space<vmem>>, vector<4x16x32xf32>
    %62 = vector.broadcast %36 : vector<1x1x32xf32> to vector<4x16x32xf32>
    %63 = arith.mulf %62, %61 : vector<4x16x32xf32>
    %64 = arith.addf %60, %63 : vector<4x16x32xf32>
    %c0_30 = arith.constant 0 : index
    %c0_31 = arith.constant 0 : index
    %c6 = arith.constant 6 : index
    %65 = vector.load %arg2[%c0_30, %c0_31, %c6] : memref<4x16x38xf32, #tpu.memory_space<vmem>>, vector<4x16x32xf32>
    %66 = vector.broadcast %39 : vector<1x1x32xf32> to vector<4x16x32xf32>
    %67 = arith.mulf %66, %65 : vector<4x16x32xf32>
    %68 = arith.addf %64, %67 : vector<4x16x32xf32>
    %c0_32 = arith.constant 0 : index
    %c0_33 = arith.constant 0 : index
    %c0_34 = arith.constant 0 : index
    %69 = vector.load %arg5[%c0_32, %c0_33, %c0_34] : memref<4x24x32xf32, #tpu.memory_space<vmem>>, vector<4x16x32xf32>
    tpu.vector_store %arg5[%c0_32, %c0_33, %c0_34], %68 {strides = array<i32>} : memref<4x24x32xf32, #tpu.memory_space<vmem>>, vector<4x16x32xf32>,
    %cst_35 = arith.constant 0.000000e+00 : f32
    %70 = vector.broadcast %cst_35 : f32 to vector<4x4x32xf32>
    %c0_36 = arith.constant 0 : index
    %c0_37 = arith.constant 0 : index
    %c0_38 = arith.constant 0 : index
    %71 = vector.load %arg3[%c0_36, %c0_37, %c0_38] : memref<4x8x38xf32, #tpu.memory_space<vmem>>, vector<4x4x32xf32>
    %72 = vector.broadcast %21 : vector<1x1x32xf32> to vector<4x4x32xf32>
    %73 = arith.mulf %72, %71 : vector<4x4x32xf32>
    %74 = arith.addf %70, %73 : vector<4x4x32xf32>
    %c0_39 = arith.constant 0 : index
    %c0_40 = arith.constant 0 : index
    %c1_41 = arith.constant 1 : index
    %75 = vector.load %arg3[%c0_39, %c0_40, %c1_41] : memref<4x8x38xf32, #tpu.memory_space<vmem>>, vector<4x4x32xf32>
    %76 = vector.broadcast %24 : vector<1x1x32xf32> to vector<4x4x32xf32>
    %77 = arith.mulf %76, %75 : vector<4x4x32xf32>
    %78 = arith.addf %74, %77 : vector<4x4x32xf32>
    %c0_42 = arith.constant 0 : index
    %c0_43 = arith.constant 0 : index
    %c2_44 = arith.constant 2 : index
    %79 = vector.load %arg3[%c0_42, %c0_43, %c2_44] : memref<4x8x38xf32, #tpu.memory_space<vmem>>, vector<4x4x32xf32>
    %80 = vector.broadcast %27 : vector<1x1x32xf32> to vector<4x4x32xf32>
    %81 = arith.mulf %80, %79 : vector<4x4x32xf32>
    %82 = arith.addf %78, %81 : vector<4x4x32xf32>
    %c0_45 = arith.constant 0 : index
    %c0_46 = arith.constant 0 : index
    %c3_47 = arith.constant 3 : index
    %83 = vector.load %arg3[%c0_45, %c0_46, %c3_47] : memref<4x8x38xf32, #tpu.memory_space<vmem>>, vector<4x4x32xf32>
    %84 = vector.broadcast %30 : vector<1x1x32xf32> to vector<4x4x32xf32>
    %85 = arith.mulf %84, %83 : vector<4x4x32xf32>
    %86 = arith.addf %82, %85 : vector<4x4x32xf32>
    %c0_48 = arith.constant 0 : index
    %c0_49 = arith.constant 0 : index
    %c4_50 = arith.constant 4 : index
    %87 = vector.load %arg3[%c0_48, %c0_49, %c4_50] : memref<4x8x38xf32, #tpu.memory_space<vmem>>, vector<4x4x32xf32>
    %88 = vector.broadcast %33 : vector<1x1x32xf32> to vector<4x4x32xf32>
    %89 = arith.mulf %88, %87 : vector<4x4x32xf32>
    %90 = arith.addf %86, %89 : vector<4x4x32xf32>
    %c0_51 = arith.constant 0 : index
    %c0_52 = arith.constant 0 : index
    %c5_53 = arith.constant 5 : index
    %91 = vector.load %arg3[%c0_51, %c0_52, %c5_53] : memref<4x8x38xf32, #tpu.memory_space<vmem>>, vector<4x4x32xf32>
    %92 = vector.broadcast %36 : vector<1x1x32xf32> to vector<4x4x32xf32>
    %93 = arith.mulf %92, %91 : vector<4x4x32xf32>
    %94 = arith.addf %90, %93 : vector<4x4x32xf32>
    %c0_54 = arith.constant 0 : index
    %c0_55 = arith.constant 0 : index
    %c6_56 = arith.constant 6 : index
    %95 = vector.load %arg3[%c0_54, %c0_55, %c6_56] : memref<4x8x38xf32, #tpu.memory_space<vmem>>, vector<4x4x32xf32>
    %96 = vector.broadcast %39 : vector<1x1x32xf32> to vector<4x4x32xf32>
    %97 = arith.mulf %96, %95 : vector<4x4x32xf32>
    %98 = arith.addf %94, %97 : vector<4x4x32xf32>
    %c0_57 = arith.constant 0 : index
    %c16 = arith.constant 16 : index
    %c0_58 = arith.constant 0 : index
    %99 = vector.load %arg5[%c0_57, %c16, %c0_58] : memref<4x24x32xf32, #tpu.memory_space<vmem>>, vector<4x4x32xf32>
    tpu.vector_store %arg5[%c0_57, %c16, %c0_58], %98 {strides = array<i32>} : memref<4x24x32xf32, #tpu.memory_space<vmem>>, vector<4x4x32xf32>,
    %cst_59 = arith.constant 0.000000e+00 : f32
    %100 = vector.broadcast %cst_59 : f32 to vector<4x16x32xf32>
    %cst_60 = arith.constant 0.000000e+00 : f32
    %101 = vector.broadcast %cst_60 : f32 to vector<4x16x32xf32>
    %c0_61 = arith.constant 0 : index
    %c0_62 = arith.constant 0 : index
    %c0_63 = arith.constant 0 : index
    %102 = vector.load %arg5[%c0_61, %c0_62, %c0_63] : memref<4x24x32xf32, #tpu.memory_space<vmem>>, vector<4x16x32xf32>
    %cst_64 = arith.constant 1.562500e-02 : f32
    %103 = vector.broadcast %cst_64 : f32 to vector<4x16x32xf32>
    %104 = arith.mulf %103, %102 : vector<4x16x32xf32>
    %105 = arith.addf %100, %104 : vector<4x16x32xf32>
    %c0_65 = arith.constant 0 : index
    %c1_66 = arith.constant 1 : index
    %c0_67 = arith.constant 0 : index
    %106 = vector.load %arg5[%c0_65, %c1_66, %c0_67] : memref<4x24x32xf32, #tpu.memory_space<vmem>>, vector<4x16x32xf32>
    %cst_68 = arith.constant 1.093750e-01 : f32
    %107 = vector.broadcast %cst_68 : f32 to vector<4x16x32xf32>
    %108 = arith.mulf %107, %106 : vector<4x16x32xf32>
    %109 = arith.addf %101, %108 : vector<4x16x32xf32>
    %c0_69 = arith.constant 0 : index
    %c1_70 = arith.constant 1 : index
    %c0_71 = arith.constant 0 : index
    %110 = vector.load %arg5[%c0_69, %c1_70, %c0_71] : memref<4x24x32xf32, #tpu.memory_space<vmem>>, vector<4x16x32xf32>
    %cst_72 = arith.constant 3.281250e-01 : f32
    %111 = vector.broadcast %cst_72 : f32 to vector<4x16x32xf32>
    %112 = arith.mulf %111, %110 : vector<4x16x32xf32>
    %113 = arith.addf %105, %112 : vector<4x16x32xf32>
    %c0_73 = arith.constant 0 : index
    %c2_74 = arith.constant 2 : index
    %c0_75 = arith.constant 0 : index
    %114 = vector.load %arg5[%c0_73, %c2_74, %c0_75] : memref<4x24x32xf32, #tpu.memory_space<vmem>>, vector<4x16x32xf32>
    %cst_76 = arith.constant 5.468750e-01 : f32
    %115 = vector.broadcast %cst_76 : f32 to vector<4x16x32xf32>
    %116 = arith.mulf %115, %114 : vector<4x16x32xf32>
    %117 = arith.addf %109, %116 : vector<4x16x32xf32>
    %c0_77 = arith.constant 0 : index
    %c2_78 = arith.constant 2 : index
    %c0_79 = arith.constant 0 : index
    %118 = vector.load %arg5[%c0_77, %c2_78, %c0_79] : memref<4x24x32xf32, #tpu.memory_space<vmem>>, vector<4x16x32xf32>
    %cst_80 = arith.constant 5.468750e-01 : f32
    %119 = vector.broadcast %cst_80 : f32 to vector<4x16x32xf32>
    %120 = arith.mulf %119, %118 : vector<4x16x32xf32>
    %121 = arith.addf %113, %120 : vector<4x16x32xf32>
    %c0_81 = arith.constant 0 : index
    %c3_82 = arith.constant 3 : index
    %c0_83 = arith.constant 0 : index
    %122 = vector.load %arg5[%c0_81, %c3_82, %c0_83] : memref<4x24x32xf32, #tpu.memory_space<vmem>>, vector<4x16x32xf32>
    %cst_84 = arith.constant 3.281250e-01 : f32
    %123 = vector.broadcast %cst_84 : f32 to vector<4x16x32xf32>
    %124 = arith.mulf %123, %122 : vector<4x16x32xf32>
    %125 = arith.addf %117, %124 : vector<4x16x32xf32>
    %c0_85 = arith.constant 0 : index
    %c3_86 = arith.constant 3 : index
    %c0_87 = arith.constant 0 : index
    %126 = vector.load %arg5[%c0_85, %c3_86, %c0_87] : memref<4x24x32xf32, #tpu.memory_space<vmem>>, vector<4x16x32xf32>
    %cst_88 = arith.constant 1.093750e-01 : f32
    %127 = vector.broadcast %cst_88 : f32 to vector<4x16x32xf32>
    %128 = arith.mulf %127, %126 : vector<4x16x32xf32>
    %129 = arith.addf %121, %128 : vector<4x16x32xf32>
    %c0_89 = arith.constant 0 : index
    %c4_90 = arith.constant 4 : index
    %c0_91 = arith.constant 0 : index
    %130 = vector.load %arg5[%c0_89, %c4_90, %c0_91] : memref<4x24x32xf32, #tpu.memory_space<vmem>>, vector<4x16x32xf32>
    %cst_92 = arith.constant 1.562500e-02 : f32
    %131 = vector.broadcast %cst_92 : f32 to vector<4x16x32xf32>
    %132 = arith.mulf %131, %130 : vector<4x16x32xf32>
    %133 = arith.addf %125, %132 : vector<4x16x32xf32>
    %c0_93 = arith.constant 0 : index
    %c0_94 = arith.constant 0 : index
    %c0_95 = arith.constant 0 : index
    %134 = vector.load %arg4[%c0_93, %c0_94, %c0_95] : memref<4x16x64xf32, #tpu.memory_space<vmem>>, vector<4x16x32xf32>
    tpu.vector_store %arg4[%c0_93, %c0_94, %c0_95], %129 {strides = array<i32>} : memref<4x16x64xf32, #tpu.memory_space<vmem>>, vector<4x16x32xf32>,
    %c0_96 = arith.constant 0 : index
    %c0_97 = arith.constant 0 : index
    %c32 = arith.constant 32 : index
    %135 = vector.load %arg4[%c0_96, %c0_97, %c32] : memref<4x16x64xf32, #tpu.memory_space<vmem>>, vector<4x16x32xf32>
    tpu.vector_store %arg4[%c0_96, %c0_97, %c32], %133 {strides = array<i32>} : memref<4x16x64xf32, #tpu.memory_space<vmem>>, vector<4x16x32xf32>,
    %c0_i32_98 = arith.constant 0 : i32
    %136 = arith.cmpi eq, %arg1, %c0_i32_98 : i32
    %137 = arith.extui %136 : i1 to i32
    %c0_i32_99 = arith.constant 0 : i32
    %138 = arith.cmpi ne, %137, %c0_i32_99 : i32
    scf.if %138 {
      %c0_102 = arith.constant 0 : index
      %c3_103 = arith.constant 3 : index
      %c0_104 = arith.constant 0 : index
      %142 = vector.load %arg5[%c0_102, %c3_103, %c0_104] : memref<4x24x32xf32, #tpu.memory_space<vmem>>, vector<4x1x32xf32>
      %c0_105 = arith.constant 0 : index
      %c2_106 = arith.constant 2 : index
      %c0_107 = arith.constant 0 : index
      %143 = vector.load %arg5[%c0_105, %c2_106, %c0_107] : memref<4x24x32xf32, #tpu.memory_space<vmem>>, vector<4x1x32xf32>
      %144 = arith.subf %142, %143 : vector<4x1x32xf32>
      %cst_108 = arith.constant 1.562500e-02 : f32
      %145 = vector.broadcast %cst_108 : f32 to vector<4x1x32xf32>
      %146 = arith.mulf %144, %145 : vector<4x1x32xf32>
      %c0_109 = arith.constant 0 : index
      %c0_110 = arith.constant 0 : index
      %c32_111 = arith.constant 32 : index
      %147 = vector.load %arg4[%c0_109, %c0_110, %c32_111] : memref<4x16x64xf32, #tpu.memory_space<vmem>>, vector<4x1x32xf32>
      %148 = arith.addf %147, %146 : vector<4x1x32xf32>
      %c0_112 = arith.constant 0 : index
      %c0_113 = arith.constant 0 : index
      %c32_114 = arith.constant 32 : index
      %149 = vector.load %arg4[%c0_112, %c0_113, %c32_114] : memref<4x16x64xf32, #tpu.memory_space<vmem>>, vector<4x1x32xf32>
      tpu.vector_store %arg4[%c0_112, %c0_113, %c32_114], %148 {strides = array<i32>} : memref<4x16x64xf32, #tpu.memory_space<vmem>>, vector<4x1x32xf32>,
    } else {
    }
    %c0_i32_100 = arith.constant 0 : i32
    %139 = arith.cmpi eq, %arg1, %c0_i32_100 : i32
    %140 = arith.extui %139 : i1 to i32
    %c0_i32_101 = arith.constant 0 : i32
    %141 = arith.cmpi ne, %140, %c0_i32_101 : i32
    scf.if %141 {
      %c0_102 = arith.constant 0 : index
      %c16_103 = arith.constant 16 : index
      %c0_104 = arith.constant 0 : index
      %142 = vector.load %arg5[%c0_102, %c16_103, %c0_104] : memref<4x24x32xf32, #tpu.memory_space<vmem>>, vector<4x1x32xf32>
      %c0_105 = arith.constant 0 : index
      %c17 = arith.constant 17 : index
      %c0_106 = arith.constant 0 : index
      %143 = vector.load %arg5[%c0_105, %c17, %c0_106] : memref<4x24x32xf32, #tpu.memory_space<vmem>>, vector<4x1x32xf32>
      %144 = arith.subf %142, %143 : vector<4x1x32xf32>
      %cst_107 = arith.constant 1.562500e-02 : f32
      %145 = vector.broadcast %cst_107 : f32 to vector<4x1x32xf32>
      %146 = arith.mulf %144, %145 : vector<4x1x32xf32>
      %c0_108 = arith.constant 0 : index
      %c15 = arith.constant 15 : index
      %c0_109 = arith.constant 0 : index
      %147 = vector.load %arg4[%c0_108, %c15, %c0_109] : memref<4x16x64xf32, #tpu.memory_space<vmem>>, vector<4x1x32xf32>
      %148 = arith.addf %147, %146 : vector<4x1x32xf32>
      %c0_110 = arith.constant 0 : index
      %c15_111 = arith.constant 15 : index
      %c0_112 = arith.constant 0 : index
      %149 = vector.load %arg4[%c0_110, %c15_111, %c0_112] : memref<4x16x64xf32, #tpu.memory_space<vmem>>, vector<4x1x32xf32>
      tpu.vector_store %arg4[%c0_110, %c15_111, %c0_112], %148 {strides = array<i32>} : memref<4x16x64xf32, #tpu.memory_space<vmem>>, vector<4x1x32xf32>,
    } else {
    }
    return
  }
  func.func @transform_0(%arg0: i32, %arg1: i32) -> (i32, i32, i32) {
    %c0_i32 = arith.constant 0 : i32
    %c0_i32_0 = arith.constant 0 : i32
    return %arg0, %arg1, %c0_i32 : i32, i32, i32
  }
  func.func @transform_1(%arg0: i32, %arg1: i32) -> (i32, i32, i32) {
    %c1_i32 = arith.constant 1 : i32
    %0 = arith.addi %arg1, %c1_i32 : i32
    %c2_i32 = arith.constant 2 : i32
    %1 = arith.muli %0, %c2_i32 : i32
    %c0_i32 = arith.constant 0 : i32
    %c0_i32_0 = arith.constant 0 : i32
    return %arg0, %1, %c0_i32 : i32, i32, i32
  }
  func.func @transform_2(%arg0: i32, %arg1: i32) -> (i32, i32, i32) {
    %c0_i32 = arith.constant 0 : i32
    %c0_i32_0 = arith.constant 0 : i32
    return %arg0, %arg1, %c0_i32 : i32, i32, i32
  }
}

</mosaic_0001>

<llo_original>
// kernel: pyr_up.1
$region0: #{pyr_up.1}
  #allocation0 [shape = 'u32[]', space=smem, size = 0x4, offset = 0x4, fixed_abs, tag = 'smem constant byte address 0x4 - core index']
  #allocation1 [shape = 'u32[144,128]{1,0:T(1,128)}', space=vmem, size = 0x12000, scoped, tag = 'internal scratch']
  #allocation2 [shape = 'f32[4,24,32]{2,1,0:T(8,128)}', space=vmem, size = 0xc000, scoped, tag = 'scratch operand']
  %s0 = inlined_call_operand.vmem [shape: f32[8,24,38], index: 0, kind: input, shape index: {}, may-alias: {0,1}]
  %s1 = inlined_call_operand.vmem [shape: f32[8,24,38], index: 1, kind: input, shape index: {}, may-alias: {0,1}]
  %s2 = inlined_call_operand.vmem [shape: f32[8,16,64], index: 2, kind: output, shape index: {}]
  %s3 = sld [smem:[#allocation0]]
  $region135: #{pyr_up.1} parent=0
    _
  %s5 = ssub.s32 1, %s3
  %s6 = scalar_select 0, %s5, %s3
  $region1: #{pyr_up.1} parent=0
    #allocation3 [shape = 'u8[65536]{0}', space=vmem, size = 0x10000, scoped, tag = 'input window, operand 0']
    #allocation4 [shape = 'u8[32768]{0}', space=vmem, size = 0x8000, scoped, tag = 'input window, operand 1']
    loop: start=0, step=1, limit=4
    $region2: #{pyr_up.1} parent=1 // loop_pre_header
      _
    $region3: #{pyr_up.1} parent=1 // loop_header
      %s8 = sphi 0, %s12
      %p9 = scmp.ge.s32.totalorder %s8, 4
      %s15 = sphi 0, %s27
      %s16 = sphi 0, %s23
      %s17 = sphi 0, %s15
      %s18 = sphi 0, %s16
      %s19 = sphi 0, %s17
      %s20 = sphi 0, %s18
      %s32 = sphi 0, %s34
      %s35 = sphi 0, %s32
      %s36 = sphi 0, %s35
      %s52 = sphi 0, %s36
      %s64 = sphi 0, %s66
      %s67 = sphi 0, %s64
      %s68 = sphi 0, %s67
      %s84 = sphi 0, %s68
      %s92 = sphi 0, %s94
      %s95 = sphi 0, %s92
      %s96 = sphi 0, %s95
      %s112 = sphi 0, %s96
    $region4: #{pyr_up.1} parent=1 // loop_header_branch
      %11 = sbr.rel (%p9) target = $region8
    $region5: #{pyr_up.1} parent=1 // loop_body
      %s13 = ssub.s32 %s8, 1
      %s14 = ssub.s32 %s8, 2
      %s21 = sadd.s32 1, %s16
      %p22 = scmp.ge.s32.totalorder %s21, 1
      %s23 = scalar_select %p22, 0, %s21
      %s24 = sadd.s32 1, %s15
      %s25 = scalar_select %p22, %s24, %s15
      %p26 = scmp.ge.s32.totalorder %s25, 2
      %s27 = scalar_select %p26, 0, %s25
      %s28 = ssub.s32 %s15, %s27
      %s29 = ssub.s32 %s16, %s23
      %s30 = sor.u32 %s28, %s29
      %p31 = scmp.eq.s32.totalorder %s30, 0
      %s33 = sadd.s32 %s32, 1
      %s34 = scalar_select %p31, %s32, %s33
      %p37 = pneg %p31
      %p38 = scmp.eq.s32.totalorder %s8, 1
      %p39 = por %p37, %p38
      %p40 = scmp.ne.s32.totalorder %s32, %s35
      %p41 = scmp.eq.s32.totalorder %s8, 0
      %p42 = por %p40, %p41
      %p43 = scmp.ne.s32.totalorder %s32, %s35
      %p44 = scmp.eq.s32.totalorder %s13, 1
      %p45 = por %p43, %p44
      %p46 = scmp.ne.s32.totalorder %s35, %s36
      %p47 = scmp.eq.s32.totalorder %s13, 0
      %p48 = por %p46, %p47
      %p49 = scmp.ne.s32.totalorder %s35, %s36
      %p50 = scmp.eq.s32.totalorder %s14, 1
      %p51 = por %p49, %p50
      %p53 = scmp.ne.s32.totalorder %s36, %s52
      %p54 = scmp.eq.s32.totalorder %s14, 0
      %p55 = por %p53, %p54
      %s56 = sadd.s32 %s16, 1
      %s57 = smul.u32 %s56, 2
      %s58 = sadd.s32 %s23, 1
      %s59 = smul.u32 %s58, 2
      %s60 = ssub.s32 %s15, %s27
      %s61 = ssub.s32 %s57, %s59
      %s62 = sor.u32 %s60, %s61
      %p63 = scmp.eq.s32.totalorder %s62, 0
      %s65 = sadd.s32 %s64, 1
      %s66 = scalar_select %p63, %s64, %s65
      %p69 = pneg %p63
      %p70 = scmp.eq.s32.totalorder %s8, 1
      %p71 = por %p69, %p70
      %p72 = scmp.ne.s32.totalorder %s64, %s67
      %p73 = scmp.eq.s32.totalorder %s8, 0
      %p74 = por %p72, %p73
      %p75 = scmp.ne.s32.totalorder %s64, %s67
      %p76 = scmp.eq.s32.totalorder %s13, 1
      %p77 = por %p75, %p76
      %p78 = scmp.ne.s32.totalorder %s67, %s68
      %p79 = scmp.eq.s32.totalorder %s13, 0
      %p80 = por %p78, %p79
      %p81 = scmp.ne.s32.totalorder %s67, %s68
      %p82 = scmp.eq.s32.totalorder %s14, 1
      %p83 = por %p81, %p82
      %p85 = scmp.ne.s32.totalorder %s68, %s84
      %p86 = scmp.eq.s32.totalorder %s14, 0
      %p87 = por %p85, %p86
      %s88 = ssub.s32 %s15, %s27
      %s89 = ssub.s32 %s16, %s23
      %s90 = sor.u32 %s88, %s89
      %p91 = scmp.eq.s32.totalorder %s90, 0
      %s93 = sadd.s32 %s92, 1
      %s94 = scalar_select %p91, %s92, %s93
      %p97 = pneg %p91
      %p98 = scmp.eq.s32.totalorder %s8, 1
      %p99 = por %p97, %p98
      %p100 = scmp.ne.s32.totalorder %s92, %s95
      %p101 = scmp.eq.s32.totalorder %s8, 0
      %p102 = por %p100, %p101
      %p103 = scmp.ne.s32.totalorder %s92, %s95
      %p104 = scmp.eq.s32.totalorder %s13, 1
      %p105 = por %p103, %p104
      %p106 = scmp.ne.s32.totalorder %s95, %s96
      %p107 = scmp.eq.s32.totalorder %s13, 0
      %p108 = por %p106, %p107
      %p109 = scmp.ne.s32.totalorder %s95, %s96
      %p110 = scmp.eq.s32.totalorder %s14, 1
      %p111 = por %p109, %p110
      %p113 = scmp.ne.s32.totalorder %s96, %s112
      %p114 = scmp.eq.s32.totalorder %s14, 0
      %p115 = por %p113, %p114
      %p116 = scmp.le.s32.totalorder 1, %s8
      %p117 = scmp.lt.s32.totalorder %s8, 3
      %p118 = pnand %p116, %p117
      %p119 = pneg %p118
      // Predicated region
      $region9: #{pyr_up.1} parent=5 // pred_check
        _
      $region10: #{pyr_up.1} parent=5 // pred_check_branch
        %121 = sbr.rel (%p118) target = $region12
      $region11: #{pyr_up.1} parent=5 // pred_region
        %s122 = ssub.s32 %s8, 1
      $region12: #{pyr_up.1} parent=5 // pred_fallthru
        _
      %p123 = scmp.lt.s32.totalorder %s8, 2
      // Predicated region
      $region13: #{pyr_up.1} parent=5 // pred_check
        %p124 = pneg %p123
      $region14: #{pyr_up.1} parent=5 // pred_check_branch
        %126 = sbr.rel (%p124) target = $region16
      $region15: #{pyr_up.1} parent=5 // pred_region
        // Predicated region
        $region17: #{pyr_up.1} parent=15 // pred_check
          %p127 = pneg %p42
        $region18: #{pyr_up.1} parent=15 // pred_check_branch
          %129 = sbr.rel (%p127) target = $region20
        $region19: #{pyr_up.1} parent=15 // pred_region
          %s130 = sand.u32 %s32, 1
          %s131 = sand.u32 %s32, 1
          %s132 = smul.addr %s131, 64
          %s133 = scalar_lea.vmem [#allocation3], %s132
          %s134 = smul.u32 4, %s15
          %s135 = smul.u32 2, %s16
          %s136 = ssub.s32 3, %s135
          %p137 = scmp.lt.s32.totalorder %s136, 2
          %s138 = scalar_select %p137, %s136, 2
          %s139 = smul.u32 512, %s138
          %p140 = scmp.ne.s32.totalorder 0, %s139
          %s141 = smul.addr %s134, 3
          %s142 = sadd.s32 %s135, %s141
          %s143 = smul.addr %s142, 8
          %s144 = scalar_lea.vmem %s0, %s143
          // Predicated region
          $region21: #{pyr_up.1} parent=19 // pred_check
            %p145 = pneg %p140
          $region22: #{pyr_up.1} parent=19 // pred_check_branch
            %147 = sbr.rel (%p145) target = $region24
          $region23: #{pyr_up.1} parent=19 // pred_region
            // Predicated region
            $region25: #{pyr_up.1} parent=23 // pred_check
              _
            $region26: #{pyr_up.1} parent=23 // pred_check_branch
              %149 = sbr.rel (0) target = $region28
            $region27: #{pyr_up.1} parent=23 // pred_region
              // Predicated region
              $region47: #{pyr_up.1} parent=27 // pred_check
                _
              $region48: #{pyr_up.1} parent=27 // pred_check_branch
                %218 = sbr.rel (0) target = $region50
              $region49: #{pyr_up.1} parent=27 // pred_region
                %s219 = sshrl.u32 %s138, 1
                // While loop
                $region51: #{pyr_up.1} parent=49 // loop_pre_header
                  _
                $region52: #{pyr_up.1} parent=49 // loop_header
                  %s221 = sphi 0, %s223
                  %p222 = scmp.ge.s32.totalorder %s221, %s219
                  %s226 = sphi 0, %s247
                  %s227 = sphi %s144, %s250
                  %s228 = sphi %s133, %s251
                $region53: #{pyr_up.1} parent=49 // loop_header_branch
                  %225 = sbr.rel (%p222) target = $region57
                $region54: #{pyr_up.1} parent=49 // loop_body
                  %v229 = vld [vmem:[%s227] sm:$0xff]
                  %230 = vst [vmem:[%s228] sm:$0xff] %v229
                  %v231 = vld [vmem:[%s227 + $0x8] sm:$0xff]
                  %232 = vst [vmem:[%s228 + $0x8] sm:$0xff] %v231
                  %v233 = vld [vmem:[%s227 + $0x18] sm:$0xff]
                  %234 = vst [vmem:[%s228 + $0x10] sm:$0xff] %v233
                  %v235 = vld [vmem:[%s227 + $0x20] sm:$0xff]
                  %236 = vst [vmem:[%s228 + $0x18] sm:$0xff] %v235
                  %v237 = vld [vmem:[%s227 + $0x30] sm:$0xff]
                  %238 = vst [vmem:[%s228 + $0x20] sm:$0xff] %v237
                  %v239 = vld [vmem:[%s227 + $0x38] sm:$0xff]
                  %240 = vst [vmem:[%s228 + $0x28] sm:$0xff] %v239
                  %v241 = vld [vmem:[%s227 + $0x48] sm:$0xff]
                  %242 = vst [vmem:[%s228 + $0x30] sm:$0xff] %v241
                  %v243 = vld [vmem:[%s227 + $0x50] sm:$0xff]
                  %244 = vst [vmem:[%s228 + $0x38] sm:$0xff] %v243
                  %s245 = sadd.s32 1, %s226
                  %p246 = scmp.ge.s32.totalorder %s245, %s219
                  %s247 = scalar_select %p246, 0, %s245
                  %s248 = smul.u32 %s247, 16
                  %s249 = smul.u32 %s247, 16
                  %s250 = scalar_lea.vmem %s144, %s248
                  %s251 = scalar_lea.vmem %s133, %s249 [#allocation3]
                $region55: #{pyr_up.1} parent=49 // loop_footer
                  %s223 = sadd.s32 %s221, 1
                $region56: #{pyr_up.1} parent=49 // loop_footer_branch
                  %220 = sbr.rel target = $region52
                $region57: #{pyr_up.1} parent=49 // loop_exit
                  _
                %s252 = sshrl.u32 %s138, 1
                %s253 = sand.u32 %s138, 1
                %s254 = smul.u32 %s252, 2
                %s255 = smul.u32 8, %s254
                %s256 = scalar_lea.vmem %s144, %s255
                %s257 = smul.u32 8, %s254
                %s258 = scalar_lea.vmem %s133, %s257 [#allocation3]
                // While loop
                $region58: #{pyr_up.1} parent=49 // loop_pre_header
                  _
                $region59: #{pyr_up.1} parent=49 // loop_header
                  %s260 = sphi 0, %s262
                  %p261 = scmp.ge.s32.totalorder %s260, %s253
                  %s265 = sphi 0, %s278
                  %s266 = sphi %s256, %s281
                  %s267 = sphi %s258, %s282
                $region60: #{pyr_up.1} parent=49 // loop_header_branch
                  %264 = sbr.rel (%p261) target = $region64
                $region61: #{pyr_up.1} parent=49 // loop_body
                  %v268 = vld [vmem:[%s266] sm:$0xff]
                  %269 = vst [vmem:[%s267] sm:$0xff] %v268
                  %v270 = vld [vmem:[%s266 + $0x18] sm:$0xff]
                  %271 = vst [vmem:[%s267 + $0x10] sm:$0xff] %v270
                  %v272 = vld [vmem:[%s266 + $0x30] sm:$0xff]
                  %273 = vst [vmem:[%s267 + $0x20] sm:$0xff] %v272
                  %v274 = vld [vmem:[%s266 + $0x48] sm:$0xff]
                  %275 = vst [vmem:[%s267 + $0x30] sm:$0xff] %v274
                  %s276 = sadd.s32 1, %s265
                  %p277 = scmp.ge.s32.totalorder %s276, %s253
                  %s278 = scalar_select %p277, 0, %s276
                  %s279 = smul.u32 %s278, 8
                  %s280 = smul.u32 %s278, 8
                  %s281 = scalar_lea.vmem %s256, %s279
                  %s282 = scalar_lea.vmem %s258, %s280 [#allocation3]
                $region62: #{pyr_up.1} parent=49 // loop_footer
                  %s262 = sadd.s32 %s260, 1
                $region63: #{pyr_up.1} parent=49 // loop_footer_branch
                  %259 = sbr.rel target = $region59
                $region64: #{pyr_up.1} parent=49 // loop_exit
                  _
              $region50: #{pyr_up.1} parent=27 // pred_fallthru
                _
              // Predicated region
              $region65: #{pyr_up.1} parent=27 // pred_check
                _
              $region66: #{pyr_up.1} parent=27 // pred_check_branch
                %284 = sbr.rel target = $region68
              $region67: #{pyr_up.1} parent=27 // pred_region
                _
              $region68: #{pyr_up.1} parent=27 // pred_fallthru
                _
            $region28: #{pyr_up.1} parent=23 // pred_fallthru
              _
            // Predicated region
            $region29: #{pyr_up.1} parent=23 // pred_check
              _
            $region30: #{pyr_up.1} parent=23 // pred_check_branch
              %151 = sbr.rel target = $region32
            $region31: #{pyr_up.1} parent=23 // pred_region
              %s153 = sshrl.u32 %s138, 1
              // While loop
              $region33: #{pyr_up.1} parent=31 // loop_pre_header
                _
              $region34: #{pyr_up.1} parent=31 // loop_header
                %s155 = sphi 0, %s157
                %p156 = scmp.ge.s32.totalorder %s155, %s153
                %s160 = sphi 0, %s181
                %s161 = sphi %s144, %s184
                %s162 = sphi %s133, %s185
              $region35: #{pyr_up.1} parent=31 // loop_header_branch
                %159 = sbr.rel (%p156) target = $region39
              $region36: #{pyr_up.1} parent=31 // loop_body
                %v163 = vld [vmem:[%s161] sm:$0xff]
                %164 = vst [vmem:[%s162] sm:$0xff] %v163
                %v165 = vld [vmem:[%s161 + $0x8] sm:$0xff]
                %166 = vst [vmem:[%s162 + $0x8] sm:$0xff] %v165
                %v167 = vld [vmem:[%s161 + $0x18] sm:$0xff]
                %168 = vst [vmem:[%s162 + $0x10] sm:$0xff] %v167
                %v169 = vld [vmem:[%s161 + $0x20] sm:$0xff]
                %170 = vst [vmem:[%s162 + $0x18] sm:$0xff] %v169
                %v171 = vld [vmem:[%s161 + $0x30] sm:$0xff]
                %172 = vst [vmem:[%s162 + $0x20] sm:$0xff] %v171
                %v173 = vld [vmem:[%s161 + $0x38] sm:$0xff]
                %174 = vst [vmem:[%s162 + $0x28] sm:$0xff] %v173
                %v175 = vld [vmem:[%s161 + $0x48] sm:$0xff]
                %176 = vst [vmem:[%s162 + $0x30] sm:$0xff] %v175
                %v177 = vld [vmem:[%s161 + $0x50] sm:$0xff]
                %178 = vst [vmem:[%s162 + $0x38] sm:$0xff] %v177
                %s179 = sadd.s32 1, %s160
                %p180 = scmp.ge.s32.totalorder %s179, %s153
                %s181 = scalar_select %p180, 0, %s179
                %s182 = smul.u32 %s181, 16
                %s183 = smul.u32 %s181, 16
                %s184 = scalar_lea.vmem %s144, %s182
                %s185 = scalar_lea.vmem %s133, %s183 [#allocation3]
              $region37: #{pyr_up.1} parent=31 // loop_footer
                %s157 = sadd.s32 %s155, 1
              $region38: #{pyr_up.1} parent=31 // loop_footer_branch
                %154 = sbr.rel target = $region34
              $region39: #{pyr_up.1} parent=31 // loop_exit
                _
              %s186 = sshrl.u32 %s138, 1
              %s187 = sand.u32 %s138, 1
              %s188 = smul.u32 %s186, 2
              %s189 = smul.u32 8, %s188
              %s190 = scalar_lea.vmem %s144, %s189
              %s191 = smul.u32 8, %s188
              %s192 = scalar_lea.vmem %s133, %s191 [#allocation3]
              // While loop
              $region40: #{pyr_up.1} parent=31 // loop_pre_header
                _
              $region41: #{pyr_up.1} parent=31 // loop_header
                %s194 = sphi 0, %s196
                %p195 = scmp.ge.s32.totalorder %s194, %s187
                %s199 = sphi 0, %s212
                %s200 = sphi %s190, %s215
                %s201 = sphi %s192, %s216
              $region42: #{pyr_up.1} parent=31 // loop_header_branch
                %198 = sbr.rel (%p195) target = $region46
              $region43: #{pyr_up.1} parent=31 // loop_body
                %v202 = vld [vmem:[%s200] sm:$0xff]
                %203 = vst [vmem:[%s201] sm:$0xff] %v202
                %v204 = vld [vmem:[%s200 + $0x18] sm:$0xff]
                %205 = vst [vmem:[%s201 + $0x10] sm:$0xff] %v204
                %v206 = vld [vmem:[%s200 + $0x30] sm:$0xff]
                %207 = vst [vmem:[%s201 + $0x20] sm:$0xff] %v206
                %v208 = vld [vmem:[%s200 + $0x48] sm:$0xff]
                %209 = vst [vmem:[%s201 + $0x30] sm:$0xff] %v208
                %s210 = sadd.s32 1, %s199
                %p211 = scmp.ge.s32.totalorder %s210, %s187
                %s212 = scalar_select %p211, 0, %s210
                %s213 = smul.u32 %s212, 8
                %s214 = smul.u32 %s212, 8
                %s215 = scalar_lea.vmem %s190, %s213
                %s216 = scalar_lea.vmem %s192, %s214 [#allocation3]
              $region44: #{pyr_up.1} parent=31 // loop_footer
                %s196 = sadd.s32 %s194, 1
              $region45: #{pyr_up.1} parent=31 // loop_footer_branch
                %193 = sbr.rel target = $region41
              $region46: #{pyr_up.1} parent=31 // loop_exit
                _
            $region32: #{pyr_up.1} parent=23 // pred_fallthru
              _
          $region24: #{pyr_up.1} parent=19 // pred_fallthru
            _
          %285 = vnop
        $region20: #{pyr_up.1} parent=15 // pred_fallthru
          _
        // Predicated region
        $region69: #{pyr_up.1} parent=15 // pred_check
          %p286 = pneg %p74
        $region70: #{pyr_up.1} parent=15 // pred_check_branch
          %288 = sbr.rel (%p286) target = $region72
        $region71: #{pyr_up.1} parent=15 // pred_region
          %s289 = sand.u32 %s64, 1
          %s290 = sand.u32 %s64, 1
          %s291 = smul.addr %s290, 32
          %s292 = scalar_lea.vmem [#allocation4], %s291
          %s293 = sadd.s32 %s16, 1
          %s294 = smul.u32 %s293, 2
          %s295 = smul.u32 4, %s15
          %s296 = smul.addr %s295, 3
          %s297 = sadd.s32 %s294, %s296
          %s298 = smul.addr %s297, 8
          %s299 = scalar_lea.vmem %s1, %s298
          // Predicated region
          $region73: #{pyr_up.1} parent=71 // pred_check
            _
          $region74: #{pyr_up.1} parent=71 // pred_check_branch
            %301 = sbr.rel (0) target = $region76
          $region75: #{pyr_up.1} parent=71 // pred_region
            // Predicated region
            $region77: #{pyr_up.1} parent=75 // pred_check
              _
            $region78: #{pyr_up.1} parent=75 // pred_check_branch
              %303 = sbr.rel (0) target = $region80
            $region79: #{pyr_up.1} parent=75 // pred_region
              // Predicated region
              $region92: #{pyr_up.1} parent=79 // pred_check
                _
              $region93: #{pyr_up.1} parent=79 // pred_check_branch
                %324 = sbr.rel (0) target = $region95
              $region94: #{pyr_up.1} parent=79 // pred_region
                loop: start=0, step=1, limit=1
                $region96: #{pyr_up.1} parent=94 // loop_pre_header
                  _
                $region97: #{pyr_up.1} parent=94 // loop_header
                  %s326 = sphi 0, %s330
                  %p327 = scmp.ge.s32.totalorder %s326, 1
                  %s331 = sphi %s299, %s299
                  %s332 = sphi %s292, %s292
                $region98: #{pyr_up.1} parent=94 // loop_header_branch
                  %329 = sbr.rel (%p327) target = $region102
                $region99: #{pyr_up.1} parent=94 // loop_body
                  %v333 = vld [vmem:[%s331] sm:$0xff]
                  %334 = vst [vmem:[%s332] sm:$0xff] %v333
                  %v335 = vld [vmem:[%s331 + $0x18] sm:$0xff]
                  %336 = vst [vmem:[%s332 + $0x8] sm:$0xff] %v335
                  %v337 = vld [vmem:[%s331 + $0x30] sm:$0xff]
                  %338 = vst [vmem:[%s332 + $0x10] sm:$0xff] %v337
                  %v339 = vld [vmem:[%s331 + $0x48] sm:$0xff]
                  %340 = vst [vmem:[%s332 + $0x18] sm:$0xff] %v339
                $region100: #{pyr_up.1} parent=94 // loop_footer
                  %s330 = sadd.s32 1, %s326
                $region101: #{pyr_up.1} parent=94 // loop_footer_branch
                  %325 = sbr.rel target = $region97
                $region102: #{pyr_up.1} parent=94 // loop_exit
                  _
              $region95: #{pyr_up.1} parent=79 // pred_fallthru
                _
              // Predicated region
              $region103: #{pyr_up.1} parent=79 // pred_check
                _
              $region104: #{pyr_up.1} parent=79 // pred_check_branch
                %342 = sbr.rel target = $region106
              $region105: #{pyr_up.1} parent=79 // pred_region
                _
              $region106: #{pyr_up.1} parent=79 // pred_fallthru
                _
            $region80: #{pyr_up.1} parent=75 // pred_fallthru
              _
            // Predicated region
            $region81: #{pyr_up.1} parent=75 // pred_check
              _
            $region82: #{pyr_up.1} parent=75 // pred_check_branch
              %305 = sbr.rel target = $region84
            $region83: #{pyr_up.1} parent=75 // pred_region
              loop: start=0, step=1, limit=1
              $region85: #{pyr_up.1} parent=83 // loop_pre_header
                _
              $region86: #{pyr_up.1} parent=83 // loop_header
                %s308 = sphi 0, %s312
                %p309 = scmp.ge.s32.totalorder %s308, 1
                %s313 = sphi %s299, %s299
                %s314 = sphi %s292, %s292
              $region87: #{pyr_up.1} parent=83 // loop_header_branch
                %311 = sbr.rel (%p309) target = $region91
              $region88: #{pyr_up.1} parent=83 // loop_body
                %v315 = vld [vmem:[%s313] sm:$0xff]
                %316 = vst [vmem:[%s314] sm:$0xff] %v315
                %v317 = vld [vmem:[%s313 + $0x18] sm:$0xff]
                %318 = vst [vmem:[%s314 + $0x8] sm:$0xff] %v317
                %v319 = vld [vmem:[%s313 + $0x30] sm:$0xff]
                %320 = vst [vmem:[%s314 + $0x10] sm:$0xff] %v319
                %v321 = vld [vmem:[%s313 + $0x48] sm:$0xff]
                %322 = vst [vmem:[%s314 + $0x18] sm:$0xff] %v321
              $region89: #{pyr_up.1} parent=83 // loop_footer
                %s312 = sadd.s32 1, %s308
              $region90: #{pyr_up.1} parent=83 // loop_footer_branch
                %307 = sbr.rel target = $region86
              $region91: #{pyr_up.1} parent=83 // loop_exit
                _
            $region84: #{pyr_up.1} parent=75 // pred_fallthru
              _
          $region76: #{pyr_up.1} parent=71 // pred_fallthru
            _
          %343 = vnop
        $region72: #{pyr_up.1} parent=15 // pred_fallthru
          _
      $region16: #{pyr_up.1} parent=5 // pred_fallthru
        _
      %p344 = scmp.le.s32.totalorder 1, %s8
      %p345 = scmp.lt.s32.totalorder %s8, 3
      %p346 = pnand %p344, %p345
      %p347 = pneg %p346
      // Predicated region
      $region107: #{pyr_up.1} parent=5 // pred_check
        _
      $region108: #{pyr_up.1} parent=5 // pred_check_branch
        %349 = sbr.rel (%p346) target = $region110
      $region109: #{pyr_up.1} parent=5 // pred_region
        %s350 = ssub.s32 %s8, 1
        %s351 = sand.u32 %s35, 1
        %s352 = sand.u32 %s35, 1
        %s353 = smul.addr %s352, 64
        %s354 = scalar_lea.vmem [#allocation3], %s353
        // Predicated region
        $region111: #{pyr_up.1} parent=109 // pred_check
          %p355 = pneg %p48
        $region112: #{pyr_up.1} parent=109 // pred_check_branch
          %357 = sbr.rel (%p355) target = $region114
        $region113: #{pyr_up.1} parent=109 // pred_region
          _
        $region114: #{pyr_up.1} parent=109 // pred_fallthru
          _
        %s358 = sand.u32 %s67, 1
        %s359 = sand.u32 %s67, 1
        %s360 = smul.addr %s359, 32
        %s361 = scalar_lea.vmem [#allocation4], %s360
        // Predicated region
        $region115: #{pyr_up.1} parent=109 // pred_check
          %p362 = pneg %p80
        $region116: #{pyr_up.1} parent=109 // pred_check_branch
          %364 = sbr.rel (%p362) target = $region118
        $region117: #{pyr_up.1} parent=109 // pred_region
          _
        $region118: #{pyr_up.1} parent=109 // pred_fallthru
          _
        %s365 = sand.u32 %s35, 1
        %s366 = sand.u32 %s35, 1
        %s367 = smul.addr %s366, 64
        %s368 = scalar_lea.vmem [#allocation3], %s367
        %p369 = pneg %p48
        %p370 = pneg %p45
        %s371 = sand.u32 %s67, 1
        %s372 = sand.u32 %s67, 1
        %s373 = smul.addr %s372, 32
        %s374 = scalar_lea.vmem [#allocation4], %s373
        %p375 = pneg %p80
        %p376 = pneg %p77
        %p377 = pneg %p108
        %p378 = pneg %p105
        %s379 = smul.u32 4, %s17
        %s380 = smul.u32 2, %s18
        %p381 = scmp.lt.s32.totalorder %s379, 7
        %s382 = scalar_select %p381, %s379, 7
        %p383 = scmp.lt.s32.totalorder %s380, 1
        %s384 = scalar_select %p383, %s380, 1
        %s385 = smul.addr %s382, 2
        %s386 = sadd.s32 %s384, %s385
        %s387 = smul.addr %s386, 8
        %s388 = scalar_lea.vmem %s2, %s387
        %s389 = smul.u32 4, %s17
        %s390 = smul.u32 2, %s18
        %s391 = ssub.s32 3, %s390
        %p392 = scmp.lt.s32.totalorder %s391, 2
        %s393 = scalar_select %p392, %s391, 2
        %s394 = smul.u32 512, %s393
        %s395 = sadd.s32 %s18, 1
        %s396 = smul.u32 %s395, 2
        %s397 = smul.u32 4, %s17
        %s398 = smul.u32 4, %s17
        %s399 = smul.u32 2, %s18
        %p400 = scmp.lt.s32.totalorder %s398, 7
        %s401 = scalar_select %p400, %s398, 7
        %p402 = scmp.lt.s32.totalorder %s399, 1
        %s403 = scalar_select %p402, %s399, 1
        %s404 = smul.addr %s401, 2
        %s405 = sadd.s32 %s403, %s404
        %s406 = smul.addr %s405, 8
        %s407 = scalar_lea.vmem %s2, %s406
        %s408 = smul.u32 4, %s17
        %s409 = smul.u32 2, %s18
        %v410 = vlaneseq
        %v411 = vand.u32 %v410, 127
        %vm412 = vcmp.lt.s32.totalorder %v411, 0
        %v413 = vsub.s32 0, %v411
        %v414 = vsel %vm412, %v413, %v411
        %v415 = vshrl.u32 %v414, 1
        %v416 = vand.u32 %v414, 1
        %v417 = vsub.s32 0, %v416
        %v418 = vsel %vm412, %v417, %v416
        %vm419 = vcmp.ne.s32.totalorder %v418, 0
        %vm420 = vcmp.lt.s32.totalorder %v418, 0
        %vm421 = vmand %vm420, %vm419
        %v422 = vadd.s32 %v418, 2
        %v423 = vsel %vm421, %v422, %v418
        %vm424 = vcmp.eq.s32.totalorder %v423, 0
        %v425 = vsel %vm424, 0.015625, 0.0
        %v426 = vsel %vm424, 0.046875, 0.109375
        %v427 = vsel %vm424, 0.28125, 0.203125
        %v428 = vsel %vm424, 0.203125, 0.28125
        %v429 = vsel %vm424, 0.109375, 0.046875
        %v430 = vsel %vm424, 0.0, 0.015625
        %v431 = vld [vmem:[%s354] sm:$0xff]
        %v432 = vld [vmem:[%s354 + $0x8] sm:$0xff]
        %v433 = vld [vmem:[%s354 + $0x10] sm:$0xff]
        %v434 = vld [vmem:[%s354 + $0x18] sm:$0xff]
        %v435 = vld [vmem:[%s354 + $0x20] sm:$0xff]
        %v436 = vld [vmem:[%s354 + $0x28] sm:$0xff]
        %v437 = vld [vmem:[%s354 + $0x30] sm:$0xff]
        %v438 = vld [vmem:[%s354 + $0x38] sm:$0xff]
        %v439 = vmul.f32 %v425, %v431
        %v440 = vmul.f32 %v425, %v432
        %v441 = vmul.f32 %v425, %v433
        %v442 = vmul.f32 %v425, %v434
        %v443 = vmul.f32 %v425, %v435
        %v444 = vmul.f32 %v425, %v436
        %v445 = vmul.f32 %v425, %v437
        %v446 = vmul.f32 %v425, %v438
        %v447 = vadd.f32 %v439, 0.0
        %v448 = vadd.f32 %v440, 0.0
        %v449 = vadd.f32 %v441, 0.0
        %v450 = vadd.f32 %v442, 0.0
        %v451 = vadd.f32 %v443, 0.0
        %v452 = vadd.f32 %v444, 0.0
        %v453 = vadd.f32 %v445, 0.0
        %v454 = vadd.f32 %v446, 0.0
        %463 = vrot.lane.b32.xlu0 %v431, 127
        %v464 = vpop.permute.xlu0 %463
        %465 = vrot.lane.b32.xlu0 %v432, 127
        %v466 = vpop.permute.xlu0 %465
        %467 = vrot.lane.b32.xlu0 %v433, 127
        %v468 = vpop.permute.xlu0 %467
        %469 = vrot.lane.b32.xlu0 %v434, 127
        %v470 = vpop.permute.xlu0 %469
        %471 = vrot.lane.b32.xlu0 %v435, 127
        %v472 = vpop.permute.xlu0 %471
        %473 = vrot.lane.b32.xlu0 %v436, 127
        %v474 = vpop.permute.xlu0 %473
        %475 = vrot.lane.b32.xlu0 %v437, 127
        %v476 = vpop.permute.xlu0 %475
        %477 = vrot.lane.b32.xlu0 %v438, 127
        %v478 = vpop.permute.xlu0 %477
        %v487 = vmul.f32 %v426, %v464
        %v488 = vmul.f32 %v426, %v466
        %v489 = vmul.f32 %v426, %v468
        %v490 = vmul.f32 %v426, %v470
        %v491 = vmul.f32 %v426, %v472
        %v492 = vmul.f32 %v426, %v474
        %v493 = vmul.f32 %v426, %v476
        %v494 = vmul.f32 %v426, %v478
        %v495 = vadd.f32 %v447, %v487
        %v496 = vadd.f32 %v448, %v488
        %v497 = vadd.f32 %v449, %v489
        %v498 = vadd.f32 %v450, %v490
        %v499 = vadd.f32 %v451, %v491
        %v500 = vadd.f32 %v452, %v492
        %v501 = vadd.f32 %v453, %v493
        %v502 = vadd.f32 %v454, %v494
        %503 = vrot.lane.b32.xlu0 %v431, 126
        %v504 = vpop.permute.xlu0 %503
        %505 = vrot.lane.b32.xlu0 %v432, 126
        %v506 = vpop.permute.xlu0 %505
        %507 = vrot.lane.b32.xlu0 %v433, 126
        %v508 = vpop.permute.xlu0 %507
        %509 = vrot.lane.b32.xlu0 %v434, 126
        %v510 = vpop.permute.xlu0 %509
        %511 = vrot.lane.b32.xlu0 %v435, 126
        %v512 = vpop.permute.xlu0 %511
        %513 = vrot.lane.b32.xlu0 %v436, 126
        %v514 = vpop.permute.xlu0 %513
        %515 = vrot.lane.b32.xlu0 %v437, 126
        %v516 = vpop.permute.xlu0 %515
        %517 = vrot.lane.b32.xlu0 %v438, 126
        %v518 = vpop.permute.xlu0 %517
        %v527 = vmul.f32 %v427, %v504
        %v528 = vmul.f32 %v427, %v506
        %v529 = vmul.f32 %v427, %v508
        %v530 = vmul.f32 %v427, %v510
        %v531 = vmul.f32 %v427, %v512
        %v532 = vmul.f32 %v427, %v514
        %v533 = vmul.f32 %v427, %v516
        %v534 = vmul.f32 %v427, %v518
        %v535 = vadd.f32 %v495, %v527
        %v536 = vadd.f32 %v496, %v528
        %v537 = vadd.f32 %v497, %v529
        %v538 = vadd.f32 %v498, %v530
        %v539 = vadd.f32 %v499, %v531
        %v540 = vadd.f32 %v500, %v532
        %v541 = vadd.f32 %v501, %v533
        %v542 = vadd.f32 %v502, %v534
        %v543 = vmul.f32 %v431, 0.34375
        %v544 = vmul.f32 %v432, 0.34375
        %v545 = vmul.f32 %v433, 0.34375
        %v546 = vmul.f32 %v434, 0.34375
        %v547 = vmul.f32 %v435, 0.34375
        %v548 = vmul.f32 %v436, 0.34375
        %v549 = vmul.f32 %v437, 0.34375
        %v550 = vmul.f32 %v438, 0.34375
        %559 = vrot.lane.b32.xlu0 %v543, 125
        %v560 = vpop.permute.xlu0 %559
        %561 = vrot.lane.b32.xlu0 %v544, 125
        %v562 = vpop.permute.xlu0 %561
        %563 = vrot.lane.b32.xlu0 %v545, 125
        %v564 = vpop.permute.xlu0 %563
        %565 = vrot.lane.b32.xlu0 %v546, 125
        %v566 = vpop.permute.xlu0 %565
        %567 = vrot.lane.b32.xlu0 %v547, 125
        %v568 = vpop.permute.xlu0 %567
        %569 = vrot.lane.b32.xlu0 %v548, 125
        %v570 = vpop.permute.xlu0 %569
        %571 = vrot.lane.b32.xlu0 %v549, 125
        %v572 = vpop.permute.xlu0 %571
        %573 = vrot.lane.b32.xlu0 %v550, 125
        %v574 = vpop.permute.xlu0 %573
        %v583 = vadd.f32 %v535, %v560
        %v584 = vadd.f32 %v536, %v562
        %v585 = vadd.f32 %v537, %v564
        %v586 = vadd.f32 %v538, %v566
        %v587 = vadd.f32 %v539, %v568
        %v588 = vadd.f32 %v540, %v570
        %v589 = vadd.f32 %v541, %v572
        %v590 = vadd.f32 %v542, %v574
        %591 = vrot.lane.b32.xlu0 %v431, 124
        %v592 = vpop.permute.xlu0 %591
        %593 = vrot.lane.b32.xlu0 %v432, 124
        %v594 = vpop.permute.xlu0 %593
        %595 = vrot.lane.b32.xlu0 %v433, 124
        %v596 = vpop.permute.xlu0 %595
        %597 = vrot.lane.b32.xlu0 %v434, 124
        %v598 = vpop.permute.xlu0 %597
        %599 = vrot.lane.b32.xlu0 %v435, 124
        %v600 = vpop.permute.xlu0 %599
        %601 = vrot.lane.b32.xlu0 %v436, 124
        %v602 = vpop.permute.xlu0 %601
        %603 = vrot.lane.b32.xlu0 %v437, 124
        %v604 = vpop.permute.xlu0 %603
        %605 = vrot.lane.b32.xlu0 %v438, 124
        %v606 = vpop.permute.xlu0 %605
        %v615 = vmul.f32 %v428, %v592
        %v616 = vmul.f32 %v428, %v594
        %v617 = vmul.f32 %v428, %v596
        %v618 = vmul.f32 %v428, %v598
        %v619 = vmul.f32 %v428, %v600
        %v620 = vmul.f32 %v428, %v602
        %v621 = vmul.f32 %v428, %v604
        %v622 = vmul.f32 %v428, %v606
        %v623 = vadd.f32 %v583, %v615
        %v624 = vadd.f32 %v584, %v616
        %v625 = vadd.f32 %v585, %v617
        %v626 = vadd.f32 %v586, %v618
        %v627 = vadd.f32 %v587, %v619
        %v628 = vadd.f32 %v588, %v620
        %v629 = vadd.f32 %v589, %v621
        %v630 = vadd.f32 %v590, %v622
        %631 = vrot.lane.b32.xlu0 %v431, 123
        %v632 = vpop.permute.xlu0 %631
        %633 = vrot.lane.b32.xlu0 %v432, 123
        %v634 = vpop.permute.xlu0 %633
        %635 = vrot.lane.b32.xlu0 %v433, 123
        %v636 = vpop.permute.xlu0 %635
        %637 = vrot.lane.b32.xlu0 %v434, 123
        %v638 = vpop.permute.xlu0 %637
        %639 = vrot.lane.b32.xlu0 %v435, 123
        %v640 = vpop.permute.xlu0 %639
        %641 = vrot.lane.b32.xlu0 %v436, 123
        %v642 = vpop.permute.xlu0 %641
        %643 = vrot.lane.b32.xlu0 %v437, 123
        %v644 = vpop.permute.xlu0 %643
        %645 = vrot.lane.b32.xlu0 %v438, 123
        %v646 = vpop.permute.xlu0 %645
        %v655 = vmul.f32 %v429, %v632
        %v656 = vmul.f32 %v429, %v634
        %v657 = vmul.f32 %v429, %v636
        %v658 = vmul.f32 %v429, %v638
        %v659 = vmul.f32 %v429, %v640
        %v660 = vmul.f32 %v429, %v642
        %v661 = vmul.f32 %v429, %v644
        %v662 = vmul.f32 %v429, %v646
        %v663 = vadd.f32 %v623, %v655
        %v664 = vadd.f32 %v624, %v656
        %v665 = vadd.f32 %v625, %v657
        %v666 = vadd.f32 %v626, %v658
        %v667 = vadd.f32 %v627, %v659
        %v668 = vadd.f32 %v628, %v660
        %v669 = vadd.f32 %v629, %v661
        %v670 = vadd.f32 %v630, %v662
        %671 = vrot.lane.b32.xlu0 %v431, 122
        %v672 = vpop.permute.xlu0 %671
        %673 = vrot.lane.b32.xlu0 %v432, 122
        %v674 = vpop.permute.xlu0 %673
        %675 = vrot.lane.b32.xlu0 %v433, 122
        %v676 = vpop.permute.xlu0 %675
        %677 = vrot.lane.b32.xlu0 %v434, 122
        %v678 = vpop.permute.xlu0 %677
        %679 = vrot.lane.b32.xlu0 %v435, 122
        %v680 = vpop.permute.xlu0 %679
        %681 = vrot.lane.b32.xlu0 %v436, 122
        %v682 = vpop.permute.xlu0 %681
        %683 = vrot.lane.b32.xlu0 %v437, 122
        %v684 = vpop.permute.xlu0 %683
        %685 = vrot.lane.b32.xlu0 %v438, 122
        %v686 = vpop.permute.xlu0 %685
        %v695 = vmul.f32 %v430, %v672
        %v696 = vmul.f32 %v430, %v674
        %v697 = vmul.f32 %v430, %v676
        %v698 = vmul.f32 %v430, %v678
        %v699 = vmul.f32 %v430, %v680
        %v700 = vmul.f32 %v430, %v682
        %v701 = vmul.f32 %v430, %v684
        %v702 = vmul.f32 %v430, %v686
        %v703 = vadd.f32 %v663, %v695
        %v704 = vadd.f32 %v664, %v696
        %v705 = vadd.f32 %v665, %v697
        %v706 = vadd.f32 %v666, %v698
        %v707 = vadd.f32 %v667, %v699
        %v708 = vadd.f32 %v668, %v700
        %v709 = vadd.f32 %v669, %v701
        %v710 = vadd.f32 %v670, %v702
        %vm711 = vcmask 261120
        %712 = vst.msk [vmem:[#allocation2] sm:$0xff] %vm711, %v703
        %713 = vst.msk [vmem:[#allocation2 + $0x8] sm:$0xff] %vm711, %v704
        %714 = vst.msk [vmem:[#allocation2 + $0x18] sm:$0xff] %vm711, %v705
        %715 = vst.msk [vmem:[#allocation2 + $0x20] sm:$0xff] %vm711, %v706
        %716 = vst.msk [vmem:[#allocation2 + $0x30] sm:$0xff] %vm711, %v707
        %717 = vst.msk [vmem:[#allocation2 + $0x38] sm:$0xff] %vm711, %v708
        %718 = vst.msk [vmem:[#allocation2 + $0x48] sm:$0xff] %vm711, %v709
        %719 = vst.msk [vmem:[#allocation2 + $0x50] sm:$0xff] %vm711, %v710
        %v720 = vld [vmem:[%s361] sm:$0xf]
        %v721 = vld [vmem:[%s361 + $0x8] sm:$0xf]
        %v722 = vld [vmem:[%s361 + $0x10] sm:$0xf]
        %v723 = vld [vmem:[%s361 + $0x18] sm:$0xf]
        %v724 = vmul.f32 %v425, %v720
        %v725 = vmul.f32 %v425, %v721
        %v726 = vmul.f32 %v425, %v722
        %v727 = vmul.f32 %v425, %v723
        %v728 = vadd.f32 %v724, 0.0
        %v729 = vadd.f32 %v725, 0.0
        %v730 = vadd.f32 %v726, 0.0
        %v731 = vadd.f32 %v727, 0.0
        %736 = vrot.lane.b32.xlu0 %v720, 127
        %v737 = vpop.permute.xlu0 %736
        %738 = vrot.lane.b32.xlu0 %v721, 127
        %v739 = vpop.permute.xlu0 %738
        %740 = vrot.lane.b32.xlu0 %v722, 127
        %v741 = vpop.permute.xlu0 %740
        %742 = vrot.lane.b32.xlu0 %v723, 127
        %v743 = vpop.permute.xlu0 %742
        %v748 = vmul.f32 %v426, %v737
        %v749 = vmul.f32 %v426, %v739
        %v750 = vmul.f32 %v426, %v741
        %v751 = vmul.f32 %v426, %v743
        %v752 = vadd.f32 %v728, %v748
        %v753 = vadd.f32 %v729, %v749
        %v754 = vadd.f32 %v730, %v750
        %v755 = vadd.f32 %v731, %v751
        %756 = vrot.lane.b32.xlu0 %v720, 126
        %v757 = vpop.permute.xlu0 %756
        %758 = vrot.lane.b32.xlu0 %v721, 126
        %v759 = vpop.permute.xlu0 %758
        %760 = vrot.lane.b32.xlu0 %v722, 126
        %v761 = vpop.permute.xlu0 %760
        %762 = vrot.lane.b32.xlu0 %v723, 126
        %v763 = vpop.permute.xlu0 %762
        %v768 = vmul.f32 %v427, %v757
        %v769 = vmul.f32 %v427, %v759
        %v770 = vmul.f32 %v427, %v761
        %v771 = vmul.f32 %v427, %v763
        %v772 = vadd.f32 %v752, %v768
        %v773 = vadd.f32 %v753, %v769
        %v774 = vadd.f32 %v754, %v770
        %v775 = vadd.f32 %v755, %v771
        %v776 = vmul.f32 %v720, 0.34375
        %v777 = vmul.f32 %v721, 0.34375
        %v778 = vmul.f32 %v722, 0.34375
        %v779 = vmul.f32 %v723, 0.34375
        %784 = vrot.lane.b32.xlu0 %v776, 125
        %v785 = vpop.permute.xlu0 %784
        %786 = vrot.lane.b32.xlu0 %v777, 125
        %v787 = vpop.permute.xlu0 %786
        %788 = vrot.lane.b32.xlu0 %v778, 125
        %v789 = vpop.permute.xlu0 %788
        %790 = vrot.lane.b32.xlu0 %v779, 125
        %v791 = vpop.permute.xlu0 %790
        %v796 = vadd.f32 %v772, %v785
        %v797 = vadd.f32 %v773, %v787
        %v798 = vadd.f32 %v774, %v789
        %v799 = vadd.f32 %v775, %v791
        %800 = vrot.lane.b32.xlu0 %v720, 124
        %v801 = vpop.permute.xlu0 %800
        %802 = vrot.lane.b32.xlu0 %v721, 124
        %v803 = vpop.permute.xlu0 %802
        %804 = vrot.lane.b32.xlu0 %v722, 124
        %v805 = vpop.permute.xlu0 %804
        %806 = vrot.lane.b32.xlu0 %v723, 124
        %v807 = vpop.permute.xlu0 %806
        %v812 = vmul.f32 %v428, %v801
        %v813 = vmul.f32 %v428, %v803
        %v814 = vmul.f32 %v428, %v805
        %v815 = vmul.f32 %v428, %v807
        %v816 = vadd.f32 %v796, %v812
        %v817 = vadd.f32 %v797, %v813
        %v818 = vadd.f32 %v798, %v814
        %v819 = vadd.f32 %v799, %v815
        %820 = vrot.lane.b32.xlu0 %v720, 123
        %v821 = vpop.permute.xlu0 %820
        %822 = vrot.lane.b32.xlu0 %v721, 123
        %v823 = vpop.permute.xlu0 %822
        %824 = vrot.lane.b32.xlu0 %v722, 123
        %v825 = vpop.permute.xlu0 %824
        %826 = vrot.lane.b32.xlu0 %v723, 123
        %v827 = vpop.permute.xlu0 %826
        %v832 = vmul.f32 %v429, %v821
        %v833 = vmul.f32 %v429, %v823
        %v834 = vmul.f32 %v429, %v825
        %v835 = vmul.f32 %v429, %v827
        %v836 = vadd.f32 %v816, %v832
        %v837 = vadd.f32 %v817, %v833
        %v838 = vadd.f32 %v818, %v834
        %v839 = vadd.f32 %v819, %v835
        %840 = vrot.lane.b32.xlu0 %v720, 122
        %v841 = vpop.permute.xlu0 %840
        %842 = vrot.lane.b32.xlu0 %v721, 122
        %v843 = vpop.permute.xlu0 %842
        %844 = vrot.lane.b32.xlu0 %v722, 122
        %v845 = vpop.permute.xlu0 %844
        %846 = vrot.lane.b32.xlu0 %v723, 122
        %v847 = vpop.permute.xlu0 %846
        %v852 = vmul.f32 %v430, %v841
        %v853 = vmul.f32 %v430, %v843
        %v854 = vmul.f32 %v430, %v845
        %v855 = vmul.f32 %v430, %v847
        %v856 = vadd.f32 %v836, %v852
        %v857 = vadd.f32 %v837, %v853
        %v858 = vadd.f32 %v838, %v854
        %v859 = vadd.f32 %v839, %v855
        %vm860 = vcmask 257024
        %861 = vst.msk [vmem:[#allocation2 + $0x10] sm:$0xf] %vm860, %v856
        %862 = vst.msk [vmem:[#allocation2 + $0x28] sm:$0xf] %vm860, %v857
        %863 = vst.msk [vmem:[#allocation2 + $0x40] sm:$0xf] %vm860, %v858
        %864 = vst.msk [vmem:[#allocation2 + $0x58] sm:$0xf] %vm860, %v859
        %v865 = vld [vmem:[#allocation2] sm:$0xff]
        %v866 = vld [vmem:[#allocation2 + $0x8] sm:$0xff]
        %v867 = vld [vmem:[#allocation2 + $0x18] sm:$0xff]
        %v868 = vld [vmem:[#allocation2 + $0x20] sm:$0xff]
        %v869 = vld [vmem:[#allocation2 + $0x30] sm:$0xff]
        %v870 = vld [vmem:[#allocation2 + $0x38] sm:$0xff]
        %v871 = vld [vmem:[#allocation2 + $0x48] sm:$0xff]
        %v872 = vld [vmem:[#allocation2 + $0x50] sm:$0xff]
        %v873 = vmul.f32 %v865, 0.015625
        %v874 = vmul.f32 %v866, 0.015625
        %v875 = vmul.f32 %v867, 0.015625
        %v876 = vmul.f32 %v868, 0.015625
        %v877 = vmul.f32 %v869, 0.015625
        %v878 = vmul.f32 %v870, 0.015625
        %v879 = vmul.f32 %v871, 0.015625
        %v880 = vmul.f32 %v872, 0.015625
        %v881 = vadd.f32 %v873, 0.0
        %v882 = vadd.f32 %v874, 0.0
        %v883 = vadd.f32 %v875, 0.0
        %v884 = vadd.f32 %v876, 0.0
        %v885 = vadd.f32 %v877, 0.0
        %v886 = vadd.f32 %v878, 0.0
        %v887 = vadd.f32 %v879, 0.0
        %v888 = vadd.f32 %v880, 0.0
        %v889 = vld [vmem:[#allocation2 + $0x1] sm:$0xff]
        %v890 = vld [vmem:[#allocation2 + $0x9] sm:$0xff]
        %v891 = vld [vmem:[#allocation2 + $0x19] sm:$0xff]
        %v892 = vld [vmem:[#allocation2 + $0x21] sm:$0xff]
        %v893 = vld [vmem:[#allocation2 + $0x31] sm:$0xff]
        %v894 = vld [vmem:[#allocation2 + $0x39] sm:$0xff]
        %v895 = vld [vmem:[#allocation2 + $0x49] sm:$0xff]
        %v896 = vld [vmem:[#allocation2 + $0x51] sm:$0xff]
        %v897 = vmul.f32 %v889, 0.109375
        %v898 = vmul.f32 %v890, 0.109375
        %v899 = vmul.f32 %v891, 0.109375
        %v900 = vmul.f32 %v892, 0.109375
        %v901 = vmul.f32 %v893, 0.109375
        %v902 = vmul.f32 %v894, 0.109375
        %v903 = vmul.f32 %v895, 0.109375
        %v904 = vmul.f32 %v896, 0.109375
        %v905 = vadd.f32 %v897, 0.0
        %v906 = vadd.f32 %v898, 0.0
        %v907 = vadd.f32 %v899, 0.0
        %v908 = vadd.f32 %v900, 0.0
        %v909 = vadd.f32 %v901, 0.0
        %v910 = vadd.f32 %v902, 0.0
        %v911 = vadd.f32 %v903, 0.0
        %v912 = vadd.f32 %v904, 0.0
        %v913 = vmul.f32 %v889, 0.328125
        %v914 = vmul.f32 %v890, 0.328125
        %v915 = vmul.f32 %v891, 0.328125
        %v916 = vmul.f32 %v892, 0.328125
        %v917 = vmul.f32 %v893, 0.328125
        %v918 = vmul.f32 %v894, 0.328125
        %v919 = vmul.f32 %v895, 0.328125
        %v920 = vmul.f32 %v896, 0.328125
        %v921 = vadd.f32 %v881, %v913
        %v922 = vadd.f32 %v882, %v914
        %v923 = vadd.f32 %v883, %v915
        %v924 = vadd.f32 %v884, %v916
        %v925 = vadd.f32 %v885, %v917
        %v926 = vadd.f32 %v886, %v918
        %v927 = vadd.f32 %v887, %v919
        %v928 = vadd.f32 %v888, %v920
        %v929 = vld [vmem:[#allocation2 + $0x2] sm:$0xff]
        %v930 = vld [vmem:[#allocation2 + $0xa] sm:$0xff]
        %v931 = vld [vmem:[#allocation2 + $0x1a] sm:$0xff]
        %v932 = vld [vmem:[#allocation2 + $0x22] sm:$0xff]
        %v933 = vld [vmem:[#allocation2 + $0x32] sm:$0xff]
        %v934 = vld [vmem:[#allocation2 + $0x3a] sm:$0xff]
        %v935 = vld [vmem:[#allocation2 + $0x4a] sm:$0xff]
        %v936 = vld [vmem:[#allocation2 + $0x52] sm:$0xff]
        %v937 = vmul.f32 %v929, 0.546875
        %v938 = vmul.f32 %v930, 0.546875
        %v939 = vmul.f32 %v931, 0.546875
        %v940 = vmul.f32 %v932, 0.546875
        %v941 = vmul.f32 %v933, 0.546875
        %v942 = vmul.f32 %v934, 0.546875
        %v943 = vmul.f32 %v935, 0.546875
        %v944 = vmul.f32 %v936, 0.546875
        %v945 = vadd.f32 %v905, %v937
        %v946 = vadd.f32 %v906, %v938
        %v947 = vadd.f32 %v907, %v939
        %v948 = vadd.f32 %v908, %v940
        %v949 = vadd.f32 %v909, %v941
        %v950 = vadd.f32 %v910, %v942
        %v951 = vadd.f32 %v911, %v943
        %v952 = vadd.f32 %v912, %v944
        %v953 = vadd.f32 %v921, %v937
        %v954 = vadd.f32 %v922, %v938
        %v955 = vadd.f32 %v923, %v939
        %v956 = vadd.f32 %v924, %v940
        %v957 = vadd.f32 %v925, %v941
        %v958 = vadd.f32 %v926, %v942
        %v959 = vadd.f32 %v927, %v943
        %v960 = vadd.f32 %v928, %v944
        %v961 = vld [vmem:[#allocation2 + $0x3] sm:$0xff]
        %v962 = vld [vmem:[#allocation2 + $0xb] sm:$0xff]
        %v963 = vld [vmem:[#allocation2 + $0x1b] sm:$0xff]
        %v964 = vld [vmem:[#allocation2 + $0x23] sm:$0xff]
        %v965 = vld [vmem:[#allocation2 + $0x33] sm:$0xff]
        %v966 = vld [vmem:[#allocation2 + $0x3b] sm:$0xff]
        %v967 = vld [vmem:[#allocation2 + $0x4b] sm:$0xff]
        %v968 = vld [vmem:[#allocation2 + $0x53] sm:$0xff]
        %v969 = vmul.f32 %v961, 0.328125
        %v970 = vmul.f32 %v962, 0.328125
        %v971 = vmul.f32 %v963, 0.328125
        %v972 = vmul.f32 %v964, 0.328125
        %v973 = vmul.f32 %v965, 0.328125
        %v974 = vmul.f32 %v966, 0.328125
        %v975 = vmul.f32 %v967, 0.328125
        %v976 = vmul.f32 %v968, 0.328125
        %v977 = vadd.f32 %v945, %v969
        %v978 = vadd.f32 %v946, %v970
        %v979 = vadd.f32 %v947, %v971
        %v980 = vadd.f32 %v948, %v972
        %v981 = vadd.f32 %v949, %v973
        %v982 = vadd.f32 %v950, %v974
        %v983 = vadd.f32 %v951, %v975
        %v984 = vadd.f32 %v952, %v976
        %v985 = vmul.f32 %v961, 0.109375
        %v986 = vmul.f32 %v962, 0.109375
        %v987 = vmul.f32 %v963, 0.109375
        %v988 = vmul.f32 %v964, 0.109375
        %v989 = vmul.f32 %v965, 0.109375
        %v990 = vmul.f32 %v966, 0.109375
        %v991 = vmul.f32 %v967, 0.109375
        %v992 = vmul.f32 %v968, 0.109375
        %v993 = vadd.f32 %v953, %v985
        %v994 = vadd.f32 %v954, %v986
        %v995 = vadd.f32 %v955, %v987
        %v996 = vadd.f32 %v956, %v988
        %v997 = vadd.f32 %v957, %v989
        %v998 = vadd.f32 %v958, %v990
        %v999 = vadd.f32 %v959, %v991
        %v1000 = vadd.f32 %v960, %v992
        %v1001 = vld [vmem:[#allocation2 + $0x4] sm:$0xff]
        %v1002 = vld [vmem:[#allocation2 + $0xc] sm:$0xff]
        %v1003 = vld [vmem:[#allocation2 + $0x1c] sm:$0xff]
        %v1004 = vld [vmem:[#allocation2 + $0x24] sm:$0xff]
        %v1005 = vld [vmem:[#allocation2 + $0x34] sm:$0xff]
        %v1006 = vld [vmem:[#allocation2 + $0x3c] sm:$0xff]
        %v1007 = vld [vmem:[#allocation2 + $0x4c] sm:$0xff]
        %v1008 = vld [vmem:[#allocation2 + $0x54] sm:$0xff]
        %v1009 = vmul.f32 %v1001, 0.015625
        %v1010 = vmul.f32 %v1002, 0.015625
        %v1011 = vmul.f32 %v1003, 0.015625
        %v1012 = vmul.f32 %v1004, 0.015625
        %v1013 = vmul.f32 %v1005, 0.015625
        %v1014 = vmul.f32 %v1006, 0.015625
        %v1015 = vmul.f32 %v1007, 0.015625
        %v1016 = vmul.f32 %v1008, 0.015625
        %v1017 = vadd.f32 %v977, %v1009
        %v1018 = vadd.f32 %v978, %v1010
        %v1019 = vadd.f32 %v979, %v1011
        %v1020 = vadd.f32 %v980, %v1012
        %v1021 = vadd.f32 %v981, %v1013
        %v1022 = vadd.f32 %v982, %v1014
        %v1023 = vadd.f32 %v983, %v1015
        %v1024 = vadd.f32 %v984, %v1016
        %1025 = vst.msk [vmem:[%s407] sm:$0xff] %vm711, %v993
        %1026 = vst.msk [vmem:[%s407 + $0x8] sm:$0xff] %vm711, %v994
        %1027 = vst.msk [vmem:[%s407 + $0x10] sm:$0xff] %vm711, %v995
        %1028 = vst.msk [vmem:[%s407 + $0x18] sm:$0xff] %vm711, %v996
        %1029 = vst.msk [vmem:[%s407 + $0x20] sm:$0xff] %vm711, %v997
        %1030 = vst.msk [vmem:[%s407 + $0x28] sm:$0xff] %vm711, %v998
        %1031 = vst.msk [vmem:[%s407 + $0x30] sm:$0xff] %vm711, %v999
        %1032 = vst.msk [vmem:[%s407 + $0x38] sm:$0xff] %vm711, %v1000
        %1041 = vrot.lane.b32.xlu0 %v1017, 32
        %v1042 = vpop.permute.xlu0 %1041
        %1043 = vrot.lane.b32.xlu0 %v1018, 32
        %v1044 = vpop.permute.xlu0 %1043
        %1045 = vrot.lane.b32.xlu0 %v1019, 32
        %v1046 = vpop.permute.xlu0 %1045
        %1047 = vrot.lane.b32.xlu0 %v1020, 32
        %v1048 = vpop.permute.xlu0 %1047
        %1049 = vrot.lane.b32.xlu0 %v1021, 32
        %v1050 = vpop.permute.xlu0 %1049
        %1051 = vrot.lane.b32.xlu0 %v1022, 32
        %v1052 = vpop.permute.xlu0 %1051
        %1053 = vrot.lane.b32.xlu0 %v1023, 32
        %v1054 = vpop.permute.xlu0 %1053
        %1055 = vrot.lane.b32.xlu0 %v1024, 32
        %v1056 = vpop.permute.xlu0 %1055
        %vm1065 = vcmask 523520
        %1066 = vst.msk [vmem:[%s407] sm:$0xff] %vm1065, %v1042
        %1067 = vst.msk [vmem:[%s407 + $0x8] sm:$0xff] %vm1065, %v1044
        %1068 = vst.msk [vmem:[%s407 + $0x10] sm:$0xff] %vm1065, %v1046
        %1069 = vst.msk [vmem:[%s407 + $0x18] sm:$0xff] %vm1065, %v1048
        %1070 = vst.msk [vmem:[%s407 + $0x20] sm:$0xff] %vm1065, %v1050
        %1071 = vst.msk [vmem:[%s407 + $0x28] sm:$0xff] %vm1065, %v1052
        %1072 = vst.msk [vmem:[%s407 + $0x30] sm:$0xff] %vm1065, %v1054
        %1073 = vst.msk [vmem:[%s407 + $0x38] sm:$0xff] %vm1065, %v1056
        %p1074 = scmp.eq.s32.totalorder %s18, 0
        // Predicated region
        $region119: #{pyr_up.1} parent=109 // pred_check
          %p1075 = pneg %p1074
        $region120: #{pyr_up.1} parent=109 // pred_check_branch
          %1077 = sbr.rel (%p1075) target = $region122
        $region121: #{pyr_up.1} parent=109 // pred_region
          %v1078 = vld [vmem:[#allocation2 + $0x3] sm:$0x1]
          %v1079 = vld [vmem:[#allocation2 + $0x1b] sm:$0x1]
          %v1080 = vld [vmem:[#allocation2 + $0x33] sm:$0x1]
          %v1081 = vld [vmem:[#allocation2 + $0x4b] sm:$0x1]
          %v1082 = vld [vmem:[#allocation2 + $0x2] sm:$0x1]
          %v1083 = vld [vmem:[#allocation2 + $0x1a] sm:$0x1]
          %v1084 = vld [vmem:[#allocation2 + $0x32] sm:$0x1]
          %v1085 = vld [vmem:[#allocation2 + $0x4a] sm:$0x1]
          %v1086 = vsub.f32 %v1078, %v1082
          %v1087 = vsub.f32 %v1079, %v1083
          %v1088 = vsub.f32 %v1080, %v1084
          %v1089 = vsub.f32 %v1081, %v1085
          %v1090 = vmul.f32 %v1086, 0.015625
          %v1091 = vmul.f32 %v1087, 0.015625
          %v1092 = vmul.f32 %v1088, 0.015625
          %v1093 = vmul.f32 %v1089, 0.015625
          %v1094 = vld [vmem:[%s407] sm:$0x1]
          %v1095 = vld [vmem:[%s407 + $0x10] sm:$0x1]
          %v1096 = vld [vmem:[%s407 + $0x20] sm:$0x1]
          %v1097 = vld [vmem:[%s407 + $0x30] sm:$0x1]
          %1102 = vrot.lane.b32.xlu0 %v1090, 32
          %v1103 = vpop.permute.xlu0 %1102
          %1104 = vrot.lane.b32.xlu0 %v1091, 32
          %v1105 = vpop.permute.xlu0 %1104
          %1106 = vrot.lane.b32.xlu0 %v1092, 32
          %v1107 = vpop.permute.xlu0 %1106
          %1108 = vrot.lane.b32.xlu0 %v1093, 32
          %v1109 = vpop.permute.xlu0 %1108
          %v1114 = vadd.f32 %v1094, %v1103
          %v1115 = vadd.f32 %v1095, %v1105
          %v1116 = vadd.f32 %v1096, %v1107
          %v1117 = vadd.f32 %v1097, %v1109
          %vm1118 = vcmask 516352
          %1119 = vst.msk [vmem:[%s407] sm:$0x1] %vm1118, %v1114
          %1120 = vst.msk [vmem:[%s407 + $0x10] sm:$0x1] %vm1118, %v1115
          %1121 = vst.msk [vmem:[%s407 + $0x20] sm:$0x1] %vm1118, %v1116
          %1122 = vst.msk [vmem:[%s407 + $0x30] sm:$0x1] %vm1118, %v1117
          %v1123 = vld [vmem:[#allocation2 + $0x10] sm:$0x1]
          %v1124 = vld [vmem:[#allocation2 + $0x28] sm:$0x1]
          %v1125 = vld [vmem:[#allocation2 + $0x40] sm:$0x1]
          %v1126 = vld [vmem:[#allocation2 + $0x58] sm:$0x1]
          %v1127 = vld [vmem:[#allocation2 + $0x11] sm:$0x1]
          %v1128 = vld [vmem:[#allocation2 + $0x29] sm:$0x1]
          %v1129 = vld [vmem:[#allocation2 + $0x41] sm:$0x1]
          %v1130 = vld [vmem:[#allocation2 + $0x59] sm:$0x1]
          %v1131 = vsub.f32 %v1123, %v1127
          %v1132 = vsub.f32 %v1124, %v1128
          %v1133 = vsub.f32 %v1125, %v1129
          %v1134 = vsub.f32 %v1126, %v1130
          %v1135 = vmul.f32 %v1131, 0.015625
          %v1136 = vmul.f32 %v1132, 0.015625
          %v1137 = vmul.f32 %v1133, 0.015625
          %v1138 = vmul.f32 %v1134, 0.015625
          %v1139 = vld [vmem:[%s407 + $0xf] sm:$0x1]
          %v1140 = vld [vmem:[%s407 + $0x1f] sm:$0x1]
          %v1141 = vld [vmem:[%s407 + $0x2f] sm:$0x1]
          %v1142 = vld [vmem:[%s407 + $0x3f] sm:$0x1]
          %v1143 = vadd.f32 %v1139, %v1135
          %v1144 = vadd.f32 %v1140, %v1136
          %v1145 = vadd.f32 %v1141, %v1137
          %v1146 = vadd.f32 %v1142, %v1138
          %vm1147 = vcmask 253952
          %1148 = vst.msk [vmem:[%s407 + $0xf] sm:$0x1] %vm1147, %v1143
          %1149 = vst.msk [vmem:[%s407 + $0x1f] sm:$0x1] %vm1147, %v1144
          %1150 = vst.msk [vmem:[%s407 + $0x2f] sm:$0x1] %vm1147, %v1145
          %1151 = vst.msk [vmem:[%s407 + $0x3f] sm:$0x1] %vm1147, %v1146
        $region122: #{pyr_up.1} parent=109 // pred_fallthru
          _
        %s1152 = smul.u32 4, %s17
        %s1153 = smul.u32 2, %s18
        %p1154 = scmp.lt.s32.totalorder %s1152, 7
        %s1155 = scalar_select %p1154, %s1152, 7
        %p1156 = scmp.lt.s32.totalorder %s1153, 1
        %s1157 = scalar_select %p1156, %s1153, 1
        %s1158 = smul.addr %s1155, 2
        %s1159 = sadd.s32 %s1157, %s1158
        %s1160 = smul.addr %s1159, 8
        %s1161 = scalar_lea.vmem %s2, %s1160
        // Predicated region
        $region123: #{pyr_up.1} parent=109 // pred_check
          %p1162 = pneg %p105
        $region124: #{pyr_up.1} parent=109 // pred_check_branch
          %1164 = sbr.rel (%p1162) target = $region126
        $region125: #{pyr_up.1} parent=109 // pred_region
          %s1165 = smul.u32 4, %s17
          %s1166 = smul.u32 2, %s18
        $region126: #{pyr_up.1} parent=109 // pred_fallthru
          _
      $region110: #{pyr_up.1} parent=5 // pred_fallthru
        _
      %p1167 = scmp.le.s32.totalorder 2, %s8
      // Predicated region
      $region127: #{pyr_up.1} parent=5 // pred_check
        %p1168 = pneg %p1167
      $region128: #{pyr_up.1} parent=5 // pred_check_branch
        %1170 = sbr.rel (%p1168) target = $region130
      $region129: #{pyr_up.1} parent=5 // pred_region
        %s1171 = ssub.s32 %s8, 2
        // Predicated region
        $region131: #{pyr_up.1} parent=129 // pred_check
          %p1172 = pneg %p111
        $region132: #{pyr_up.1} parent=129 // pred_check_branch
          %1174 = sbr.rel (%p1172) target = $region134
        $region133: #{pyr_up.1} parent=129 // pred_region
          %s1175 = smul.u32 4, %s19
          %s1176 = smul.u32 2, %s20
          %p1177 = scmp.lt.s32.totalorder %s1175, 7
          %s1178 = scalar_select %p1177, %s1175, 7
          %p1179 = scmp.lt.s32.totalorder %s1176, 1
          %s1180 = scalar_select %p1179, %s1176, 1
          %s1181 = smul.addr %s1178, 2
          %s1182 = sadd.s32 %s1180, %s1181
          %s1183 = smul.addr %s1182, 8
          %s1184 = scalar_lea.vmem %s2, %s1183
        $region134: #{pyr_up.1} parent=129 // pred_fallthru
          _
      $region130: #{pyr_up.1} parent=5 // pred_fallthru
        _
    $region6: #{pyr_up.1} parent=1 // loop_footer
      %s12 = sadd.s32 1, %s8
    $region7: #{pyr_up.1} parent=1 // loop_footer_branch
      %7 = sbr.rel target = $region3
    $region8: #{pyr_up.1} parent=1 // loop_exit
      _

</llo_original>
